<compile_context>
chip_gen: v6e
topology: v6e:2x2x1
jax: 0.10.0
libtpu: 0.0.40
codegen_flags: <defaults>
</compile_context>

<pallas_src>
import functools

import jax
import jax.numpy as jnp
from jax import lax
from jax.experimental import pallas as pl
from jax.experimental.pallas import tpu as pltpu

F32 = jnp.float32
MXU = jnp.bfloat16        # MXU operand dtype; accumulation stays f32.


def _parallel(n_axes=1):
    return pltpu.CompilerParams(dimension_semantics=("parallel",) * n_axes)


def _pick_tile(n, target):
    """Largest tile <= target that divides n and keeps (8,128) block legality."""
    if n <= target:
        return n
    for d in range(target, 0, -1):
        if n % d == 0 and d % 8 == 0:
            return d
    return n


# ----------------------------------------------------------------------------
# Kernel 1: row-tiled dense layer (x @ W + b), optional ReLU.
# Used only for the hoisted GRU input projection (both dirs / all gates at once).
# ----------------------------------------------------------------------------
def _linear_kernel(x_ref, w_ref, b_ref, o_ref, *, relu):
    y = jnp.dot(x_ref[...].astype(MXU), w_ref[...].astype(MXU),
                preferred_element_type=jnp.float32)
    y = y + b_ref[...]
    if relu:
        y = jnp.maximum(y, 0.0)
    o_ref[...] = y.astype(o_ref.dtype)


def linear(x2d, w_t, b_row, relu=False, tm_target=512):
    M, K = x2d.shape
    N = w_t.shape[1]
    TM = _pick_tile(M, tm_target)
    return pl.pallas_call(
        functools.partial(_linear_kernel, relu=relu),
        out_shape=jax.ShapeDtypeStruct((M, N), F32),
        grid=(M // TM,),
        in_specs=[pl.BlockSpec((TM, K), lambda i: (i, 0)),
                  pl.BlockSpec((K, N), lambda i: (0, 0)),
                  pl.BlockSpec((1, N), lambda i: (0, 0))],
        out_specs=pl.BlockSpec((TM, N), lambda i: (i, 0)),
        compiler_params=_parallel(),
    )(x2d, w_t, b_row)


# ----------------------------------------------------------------------------
# Kernel 2: char CNN (Conv1d k=5) + max-over-time.
# im2col happens in VMEM as ksize shifted matmuls against per-tap (C,H) blocks.
# ----------------------------------------------------------------------------
def _char_cnn_kernel(x_ref, w_ref, b_ref, o_ref, *, ksize, lout):
    x = x_ref[...].astype(MXU)                               # (TN, L, C)
    acc = jnp.zeros((x.shape[0], lout, b_ref.shape[-1]), jnp.float32)
    for p in range(ksize):                                   # 5 shifted matmuls
        acc = acc + lax.dot_general(
            x[:, p:p + lout, :], w_ref[p].astype(MXU),
            (((2,), (0,)), ((), ())), preferred_element_type=jnp.float32)
    acc = acc + b_ref[...][None]                             # (1,1,H) bias broadcast
    o_ref[...] = jnp.max(acc, axis=1).astype(o_ref.dtype)    # max over time


def char_cnn_max(x_nlc, w_kch, b_row, ksize=5):
    # x_nlc: (N, L, C) ; w_kch: repacked Conv1d weight (K, C, H)
    N, L, C = x_nlc.shape
    H = w_kch.shape[-1]
    lout = L - ksize + 1
    TN = _pick_tile(N, 256)
    return pl.pallas_call(
        functools.partial(_char_cnn_kernel, ksize=ksize, lout=lout),
        out_shape=jax.ShapeDtypeStruct((N, H), F32),
        grid=(N // TN,),
        in_specs=[pl.BlockSpec((TN, L, C), lambda i: (i, 0, 0)),
                  pl.BlockSpec((ksize, C, H), lambda i: (0, 0, 0)),
                  pl.BlockSpec((1, H), lambda i: (0, 0))],
        out_specs=pl.BlockSpec((TN, H), lambda i: (i, 0)),
        compiler_params=_parallel(),
    )(x_nlc, w_kch, b_row)


# ----------------------------------------------------------------------------
# Kernel 3: fused bidirectional GRU recurrence (PyTorch gate order r,z,n),
# grid=(2,) over direction (parallel -> both TCs on v7x).  The input projection
# gi = x @ W_ih + b_ih is precomputed outside (hoisted).  Length mask reproduces
# pack_padded_sequence semantics: hidden only advances on valid steps, padded
# outputs are zero, backward pass starts at the last valid token.
# ----------------------------------------------------------------------------
def _bigru_kernel(gi_ref, m_ref, whh_ref, bhh_ref, o_ref, h_scr, *, T):
    # gi_ref : (3, T, B, H)  gates r,z,n for THIS direction (already + b_ih)
    # whh_ref: (3, H, H) bf16 ; bhh_ref: (3, 1, H) f32 ; o_ref: (T, B, H)
    is_rev = pl.program_id(0) == 1
    h_scr[...] = jnp.zeros(h_scr.shape, h_scr.dtype)
    w_r = whh_ref[0]                     # hoisted weight loads (once per direction)
    w_z = whh_ref[1]
    w_n = whh_ref[2]
    b_r = bhh_ref[0]
    b_z = bhh_ref[1]
    b_n = bhh_ref[2]

    def step(i, carry):
        t = jnp.where(is_rev, T - 1 - i, i)
        m_t = m_ref[t]                                            # (B, 1)
        h = h_scr[...]                                            # (B, H) f32
        hb = h.astype(MXU)
        gh_r = jnp.dot(hb, w_r, preferred_element_type=jnp.float32) + b_r
        gh_z = jnp.dot(hb, w_z, preferred_element_type=jnp.float32) + b_z
        gh_n = jnp.dot(hb, w_n, preferred_element_type=jnp.float32) + b_n
        r = jax.nn.sigmoid(gi_ref[0, t] + gh_r)
        z = jax.nn.sigmoid(gi_ref[1, t] + gh_z)
        n = jnp.tanh(gi_ref[2, t] + r * gh_n)
        h_new = (1.0 - z) * n + z * h
        h_upd = m_t * h_new + (1.0 - m_t) * h
        h_scr[...] = h_upd
        o_ref[t] = (m_t * h_upd).astype(o_ref.dtype)
        return carry

    lax.fori_loop(0, T, step, 0)


def bigru(x_btd, mask_bt, p):
    """EncoderRNN(nlayers=1, bidir=True, concat=True) in eval mode."""
    B, T, D = x_btd.shape
    H = p["whh_all"].shape[-1]
    # Hoisted input projection: one (T*B, D) @ (D, 6H) matmul for both directions.
    x_tbd = jnp.transpose(x_btd, (1, 0, 2))
    gi2d = linear(x_tbd.reshape(T * B, D), p["wih_all"], p["bih_all"])   # (T*B, 6H)
    gi = gi2d.reshape(T, B, 6, H).transpose(2, 0, 1, 3)                  # (6, T, B, H)
    m_tb1 = jnp.transpose(mask_bt, (1, 0))[:, :, None].astype(F32)       # (T, B, 1)
    out = pl.pallas_call(
        functools.partial(_bigru_kernel, T=T),
        out_shape=jax.ShapeDtypeStruct((2, T, B, H), F32),
        grid=(2,),                                                       # direction axis
        in_specs=[pl.BlockSpec((3, T, B, H), lambda d: (d, 0, 0, 0)),
                  pl.BlockSpec((T, B, 1), lambda d: (0, 0, 0)),
                  pl.BlockSpec((3, H, H), lambda d: (d, 0, 0)),
                  pl.BlockSpec((3, 1, H), lambda d: (d, 0, 0))],
        # leading direction dim squeezed out of the kernel Ref
        out_specs=pl.BlockSpec((None, T, B, H), lambda d: (d, 0, 0, 0)),
        scratch_shapes=[pltpu.VMEM((B, H), jnp.float32)],
        compiler_params=_parallel(),
    )(gi, m_tb1, p["whh_all"], p["bhh_all"])
    # TODO(synk): at production sequence lengths, chunk the T axis (arbitrary grid
    # axis with carried h) so per-direction blocks fit v7x's 64 MiB VMEM.
    out = jnp.concatenate([out[0], out[1]], axis=-1)                     # (T, B, 2H)
    return jnp.transpose(out, (1, 0, 2))                                 # (B, T, 2H)


# ----------------------------------------------------------------------------
# Kernel 4: fused BiAttention + following Linear(+ReLU) [+ optional Linear(H,1)],
# one batch element per grid step.  The 4-way feature concat is replaced by four
# block matmuls against the row-split projection weight.
# ----------------------------------------------------------------------------
def _biatt_fused_kernel(inp_ref, mem_ref, mask_ref, win_ref, wmem_ref, scale_ref,
                        wproj_ref, bproj_ref, *rest, with_sp):
    if with_sp:
        wsp_ref, bsp_ref, o_ref = rest
    else:
        (o_ref,) = rest

    x = inp_ref[0]                                           # (Li, D) f32
    m = mem_ref[0]                                           # (Lm, D) f32
    msk = mask_ref[0]                                        # (1, Lm) f32
    w_in = win_ref[...]                                      # (1, D)
    w_mem = wmem_ref[...]                                    # (1, D)
    scale = scale_ref[...]                                   # (1, D)
    mb = m.astype(MXU)

    input_dot = jnp.sum(x * w_in, axis=1, keepdims=True)                      # (Li, 1)
    memory_dot = lax.dot_general(w_mem, m, (((1,), (1,)), ((), ())),
                                 preferred_element_type=jnp.float32)          # (1, Lm)
    cross = lax.dot_general((x * scale).astype(MXU), mb, (((1,), (1,)), ((), ())),
                            preferred_element_type=jnp.float32)               # (Li, Lm)
    att = input_dot + memory_dot + cross - 1e30 * (1.0 - msk)                 # f32

    # softmax over memory (manual, EUP reciprocal)
    mx = jnp.max(att, axis=-1, keepdims=True)                                 # (Li, 1)
    e = jnp.exp(att - mx)
    wt1 = e * pl.reciprocal(jnp.sum(e, axis=-1, keepdims=True), approx=True)  # (Li, Lm)
    out1 = jnp.dot(wt1.astype(MXU), mb, preferred_element_type=jnp.float32)   # (Li, D)

    # softmax over input rows of att.max(-1) (== mx)
    mx2 = jnp.max(mx, axis=0, keepdims=True)                                  # (1, 1)
    e2 = jnp.exp(mx - mx2)                                                    # (Li, 1)
    wt2 = e2 * pl.reciprocal(jnp.sum(e2, axis=0, keepdims=True), approx=True)
    out2 = lax.dot_general(wt2, x, (((0,), (0,)), ((), ())),
                           preferred_element_type=jnp.float32)                # (1, D)

    # fused projection over [x, out1, x*out1, out2*out1] without materializing a concat
    f2 = x * out1
    f3 = out2 * out1
    proj = (jnp.dot(x.astype(MXU), wproj_ref[0], preferred_element_type=jnp.float32)
            + jnp.dot(out1.astype(MXU), wproj_ref[1], preferred_element_type=jnp.float32)
            + jnp.dot(f2.astype(MXU), wproj_ref[2], preferred_element_type=jnp.float32)
            + jnp.dot(f3.astype(MXU), wproj_ref[3], preferred_element_type=jnp.float32)
            + bproj_ref[...])
    y = jnp.maximum(proj, 0.0)                                                # (Li, Hout)

    if with_sp:
        sp = jnp.dot(y.astype(MXU), wsp_ref[...], preferred_element_type=jnp.float32)
        o_ref[0] = (sp + bsp_ref[...]).astype(o_ref.dtype)                    # (Li, 1)
    else:
        o_ref[0] = y.astype(o_ref.dtype)                                      # (Li, Hout)


def biatt_proj(inp, mem, mask2d, w_in, w_mem, scale, wproj4, bproj, wsp=None, bsp=None):
    B, Li, D = inp.shape
    Lm = mem.shape[1]
    Hout = wproj4.shape[-1]
    with_sp = wsp is not None
    out_dim = 1 if with_sp else Hout
    mask3 = mask2d.reshape(B, 1, Lm).astype(F32)
    in_specs = [
        pl.BlockSpec((1, Li, D), lambda b: (b, 0, 0)),
        pl.BlockSpec((1, Lm, D), lambda b: (b, 0, 0)),
        pl.BlockSpec((1, 1, Lm), lambda b: (b, 0, 0)),
        pl.BlockSpec((1, D), lambda b: (0, 0)),
        pl.BlockSpec((1, D), lambda b: (0, 0)),
        pl.BlockSpec((1, D), lambda b: (0, 0)),
        pl.BlockSpec((4, D, Hout), lambda b: (0, 0, 0)),
        pl.BlockSpec((1, Hout), lambda b: (0, 0)),
    ]
    args = [inp, mem, mask3, w_in, w_mem, scale, wproj4, bproj]
    if with_sp:
        in_specs += [pl.BlockSpec((Hout, 1), lambda b: (0, 0)),
                     pl.BlockSpec((1, 1), lambda b: (0, 0))]
        args += [wsp, bsp]
    return pl.pallas_call(
        functools.partial(_biatt_fused_kernel, with_sp=with_sp),
        out_shape=jax.ShapeDtypeStruct((B, Li, out_dim), F32),
        grid=(B,),
        in_specs=in_specs,
        out_specs=pl.BlockSpec((1, Li, out_dim), lambda b: (b, 0, 0)),
        compiler_params=_parallel(),
    )(*args)


# ----------------------------------------------------------------------------
# Kernel 5: mean_pooling_module (mapping^T @ emb, length-normalized) + a compact
# per-sentence (S,1) mask (== any pooled feature > 0; pooled features are >= 0).
# ----------------------------------------------------------------------------
def _mean_pool_kernel(map_ref, emb_ref, res_ref, msk_ref):
    A = map_ref[0]                                           # (P, S) 0/1
    X = emb_ref[0]                                           # (P, H) >= 0 (post-ReLU)
    se = lax.dot_general(A.astype(MXU), X.astype(MXU), (((0,), (0,)), ((), ())),
                         preferred_element_type=jnp.float32)             # (S, H)
    ones = jnp.ones((A.shape[0], 1), jnp.float32)
    slen = lax.dot_general(A, ones, (((0,), (0,)), ((), ())),
                           preferred_element_type=jnp.float32)           # (S, 1)
    slen = jnp.where(slen == 0.0, 1.0, slen)
    # TODO(synk): reference builds a (B,S,H) element mask and feeds it to BiAttention,
    # whose broadcast is shape-invalid in PyTorch; we emit the per-sentence collapse.
    msk_ref[0] = (jnp.max(se, axis=-1, keepdims=True) > 0.0).astype(msk_ref.dtype)
    res_ref[0] = (se / slen).astype(res_ref.dtype)


def mean_pooling(all_mapping, emb):
    B, P, S = all_mapping.shape
    H = emb.shape[2]
    return pl.pallas_call(
        _mean_pool_kernel,
        out_shape=(jax.ShapeDtypeStruct((B, S, H), F32),
                   jax.ShapeDtypeStruct((B, S, 1), F32)),
        grid=(B,),
        in_specs=[pl.BlockSpec((1, P, S), lambda b: (b, 0, 0)),
                  pl.BlockSpec((1, P, H), lambda b: (b, 0, 0))],
        out_specs=(pl.BlockSpec((1, S, H), lambda b: (b, 0, 0)),
                   pl.BlockSpec((1, S, 1), lambda b: (b, 0, 0))),
        compiler_params=_parallel(),
    )(all_mapping, emb)


# ----------------------------------------------------------------------------
# SPModel: parameters + forward
# ----------------------------------------------------------------------------
class Config:
    def __init__(self, glove_dim, char_dim, char_hidden, hidden, keep_prob, save):
        self.glove_dim = glove_dim
        self.char_dim = char_dim
        self.char_hidden = char_hidden
        self.hidden = hidden
        self.keep_prob = keep_prob
        self.save = save


def init_params(key, cfg, n_words, n_chars):
    keys = iter(jax.random.split(key, 32))

    def nrm(shape, std=0.1):
        return std * jax.random.normal(next(keys), shape, F32)

    def unif(shape, hi):
        return jax.random.uniform(next(keys), shape, F32, 0.0, hi)

    H = cfg.hidden
    C = cfg.char_dim
    CH = cfg.char_hidden
    D_rnn = CH + cfg.glove_dim

    def split_gates(w):            # (X, 3H) -> (3, X, H), PyTorch gate order r,z,n
        return jnp.stack([w[:, :H], w[:, H:2 * H], w[:, 2 * H:]], axis=0)

    wih_f, whh_f = nrm((D_rnn, 3 * H)), nrm((H, 3 * H))
    bih_f, bhh_f = nrm((1, 3 * H), 0.01), nrm((1, 3 * H), 0.01)
    wih_b, whh_b = nrm((D_rnn, 3 * H)), nrm((H, 3 * H))
    bih_b, bhh_b = nrm((1, 3 * H), 0.01), nrm((1, 3 * H), 0.01)

    cnn_w = nrm((CH, C, 5))        # PyTorch Conv1d weight layout (H, C, K)
    lin1_wt = nrm((8 * H, H))
    # TODO(synk): reference declares Linear(hidden*8, hidden) but BiAttention(hidden)
    # emits 4*hidden features; use in_features = 4*hidden so the graph is well-formed.
    lsent_wt = nrm((4 * H, H))
    lsp_wt = nrm((H, 1))

    return {
        "word_mat": nrm((n_words, cfg.glove_dim), 1.0).at[0].set(0.0),
        "char_mat": nrm((n_chars, cfg.char_dim), 1.0).at[0].set(0.0),
        # char CNN weight repacked to (K, C, H) for the shifted-matmul kernel
        "cnn_w": jnp.transpose(cnn_w, (2, 1, 0)).astype(MXU),
        "cnn_b": nrm((CH,), 0.01).reshape(1, CH),
        "rnn": {
            # both directions / all gates packed for one hoisted input projection
            "wih_all": jnp.concatenate([wih_f, wih_b], axis=1).astype(MXU),      # (D, 6H)
            "bih_all": jnp.concatenate([bih_f, bih_b], axis=1),                  # (1, 6H)
            "whh_all": jnp.concatenate([split_gates(whh_f),
                                        split_gates(whh_b)], axis=0).astype(MXU),  # (6,H,H)
            "bhh_all": jnp.concatenate([split_gates(bhh_f),
                                        split_gates(bhh_b)], axis=0),              # (6,1,H)
        },
        # qc_att: BiAttention(2H) (+ fused linear_1)
        "qc_w_in": nrm((1, 2 * H)), "qc_w_mem": nrm((1, 2 * H)),
        "qc_scale": unif((1, 2 * H), 1.0 / (2 * H) ** 0.5),
        "lin1_w4": lin1_wt.reshape(4, 2 * H, H).astype(MXU), "lin1_b": nrm((1, H), 0.01),
        # self_att_sentences: BiAttention(H) (+ fused linear_sent_att + linear_sp)
        "sa_w_in": nrm((1, H)), "sa_w_mem": nrm((1, H)),
        "sa_scale": unif((1, H), 1.0 / H ** 0.5),
        "lsent_w4": lsent_wt.reshape(4, H, H).astype(MXU), "lsent_b": nrm((1, H), 0.01),
        "lsp_wt": lsp_wt.astype(MXU), "lsp_b": nrm((1, 1), 0.01),
    }


def sp_model_forward(params, cfg, context_idxs, ques_idxs, context_char_idxs,
                     ques_char_idxs, context_lens, start_mapping, end_mapping,
                     all_mapping):
    bsz, para = context_idxs.shape
    ques = ques_idxs.shape[1]
    char_size = context_char_idxs.shape[2]

    context_mask = (context_idxs > 0).astype(F32)  # as in reference (unused downstream)
    ques_mask = (ques_idxs > 0).astype(F32)

    # char embedding (gather stays in XLA) -> char CNN -> max over time
    ctx_ch = params["char_mat"][context_char_idxs.reshape(-1, char_size)]
    q_ch = params["char_mat"][ques_char_idxs.reshape(-1, char_size)]
    ctx_ch = char_cnn_max(ctx_ch, params["cnn_w"], params["cnn_b"]).reshape(bsz, para, -1)
    q_ch = char_cnn_max(q_ch, params["cnn_w"], params["cnn_b"]).reshape(bsz, ques, -1)

    ctx_w = params["word_mat"][context_idxs]
    q_w = params["word_mat"][ques_idxs]
    context_output = jnp.concatenate([ctx_w, ctx_ch], axis=2)
    ques_output = jnp.concatenate([q_w, q_ch], axis=2)

    # EncoderRNN (bidirectional GRU, 1 layer, concat), fused fwd+bwd kernel
    ctx_tmask = (jnp.arange(para)[None, :] < context_lens[:, None]).astype(F32)
    q_tmask = jnp.ones((bsz, ques), F32)
    context_output = bigru(context_output, ctx_tmask, params["rnn"])   # (B, P, 2H)
    ques_output = bigru(ques_output, q_tmask, params["rnn"])           # (B, Q, 2H)

    # question-context bi-attention fused with linear_1 (ReLU)
    output = biatt_proj(context_output, ques_output, ques_mask,
                        params["qc_w_in"], params["qc_w_mem"], params["qc_scale"],
                        params["lin1_w4"], params["lin1_b"])           # (B, P, H)

    # sentence mean pooling (per-sentence mask)
    sent_res, sent_mask = mean_pooling(all_mapping, output)            # (B,S,H),(B,S,1)

    # sentence self-attention fused with linear_sent_att (ReLU) and linear_sp
    sp_t = biatt_proj(sent_res, sent_res, sent_mask[..., 0],
                      params["sa_w_in"], params["sa_w_mem"], params["sa_scale"],
                      params["lsent_w4"], params["lsent_b"],
                      wsp=params["lsp_wt"], bsp=params["lsp_b"])       # (B, S, 1)

    sp_aux = jnp.zeros_like(sp_t)
    predict_support = jnp.concatenate([sp_aux, sp_t], axis=-1)         # (B, S, 2)
    return predict_support


if __name__ == "__main__":
    cfg = Config(glove_dim=16, char_dim=8, char_hidden=16, hidden=32, keep_prob=1.0, save=False)
    n_words, n_chars = 40, 20
    bsz, para, ques, char_size, n_sent = 2, 16, 8, 8, 4

    root = jax.random.PRNGKey(0)
    kp, kd = jax.random.split(root)
    params = init_params(kp, cfg, n_words, n_chars)

    d = iter(jax.random.split(kd, 8))
    context_lens = jnp.array([16, 12], jnp.int32)                 # descending (pack_padded)
    context_idxs = jax.random.randint(next(d), (bsz, para), 1, n_words)
    context_idxs = jnp.where(jnp.arange(para)[None, :] < context_lens[:, None], context_idxs, 0)
    ques_idxs = jax.random.randint(next(d), (bsz, ques), 1, n_words)
    context_char_idxs = jax.random.randint(next(d), (bsz, para, char_size), 1, n_chars)
    ques_char_idxs = jax.random.randint(next(d), (bsz, ques, char_size), 1, n_chars)

    sent_id = jnp.minimum(jnp.arange(para) // (para // n_sent), n_sent - 1)
    all_mapping = jnp.tile(jax.nn.one_hot(sent_id, n_sent, dtype=F32)[None], (bsz, 1, 1))
    all_mapping = all_mapping * (jnp.arange(para)[None, :, None]
                                 < context_lens[:, None, None]).astype(F32)
    start_mapping = jnp.zeros((bsz, para, n_sent), F32)           # unused by forward (as in ref)
    end_mapping = jnp.zeros((bsz, para, n_sent), F32)             # unused by forward (as in ref)

    out = sp_model_forward(params, cfg, context_idxs, ques_idxs, context_char_idxs,
                           ques_char_idxs, context_lens, start_mapping, end_mapping,
                           all_mapping)
    out = jax.block_until_ready(out)
    assert out.shape == (bsz, n_sent, 2) and out.dtype == F32
    assert bool(jnp.all(jnp.isfinite(out)))
    print("KERNEL_OK")
</pallas_src>

<mosaic_0001>
module attributes {stable_mosaic.version = 11 : i64} {
  func.func @_char_cnn_kernel(%arg0: i32, %arg1: memref<32x8x8xf32, #tpu.memory_space<vmem>>, %arg2: memref<5x8x16xbf16, #tpu.memory_space<vmem>>, %arg3: memref<1x16xf32, #tpu.memory_space<vmem>>, %arg4: memref<32x16xf32, #tpu.memory_space<vmem>>) attributes {dimension_semantics = [#tpu.dimension_semantics<parallel>], iteration_bounds = array<i64: 1>, scalar_prefetch = 0 : i64, scratch_operands = 0 : i64, tpu.core_type = #tpu.core_type<tc>, window_params = [{transform_indices = @transform_0, window_bounds = array<i64: 32, 8, 8>}, {pipeline_mode = #tpu.pipeline_mode<synchronous>, transform_indices = @transform_1, window_bounds = array<i64: 5, 8, 16>}, {pipeline_mode = #tpu.pipeline_mode<synchronous>, transform_indices = @transform_2, window_bounds = array<i64: 1, 16>}, {transform_indices = @transform_3, window_bounds = array<i64: 32, 16>}]} {
    %c0 = arith.constant 0 : index
    %c0_0 = arith.constant 0 : index
    %c0_1 = arith.constant 0 : index
    %0 = vector.load %arg1[%c0, %c0_0, %c0_1] : memref<32x8x8xf32, #tpu.memory_space<vmem>>, vector<32x8x8xf32>
    %1 = arith.truncf %0 : vector<32x8x8xf32> to vector<32x8x8xbf16>
    %cst = arith.constant 0.000000e+00 : f32
    %2 = vector.broadcast %cst : f32 to vector<32x4x16xf32>
    %3 = vector.extract_strided_slice %1 {offsets = [0, 0, 0], sizes = [32, 4, 8], strides = [1, 1, 1]} : vector<32x8x8xbf16> to vector<32x4x8xbf16>
    %c0_2 = arith.constant 0 : index
    %c0_3 = arith.constant 0 : index
    %c0_4 = arith.constant 0 : index
    %4 = vector.load %arg2[%c0_2, %c0_3, %c0_4] : memref<5x8x16xbf16, #tpu.memory_space<vmem>>, vector<1x8x16xbf16>
    %5 = vector.shape_cast %4 : vector<1x8x16xbf16> to vector<8x16xbf16>
    %cst_5 = arith.constant dense<0.000000e+00> : vector<32x4x16xf32>
    %6 = tpu.matmul %3, %5, %cst_5 {dimension_numbers = #tpu.dot_dimension_numbers<[2], [0], [0, 1], [1], [0, 0, 0, 1, 1, 1], [], []>} : vector<32x4x8xbf16>, vector<8x16xbf16>, vector<32x4x16xf32> -> vector<32x4x16xf32>
    %7 = arith.addf %2, %6 : vector<32x4x16xf32>
    %8 = vector.extract_strided_slice %1 {offsets = [0, 1, 0], sizes = [32, 4, 8], strides = [1, 1, 1]} : vector<32x8x8xbf16> to vector<32x4x8xbf16>
    %c1 = arith.constant 1 : index
    %c0_6 = arith.constant 0 : index
    %c0_7 = arith.constant 0 : index
    %9 = vector.load %arg2[%c1, %c0_6, %c0_7] : memref<5x8x16xbf16, #tpu.memory_space<vmem>>, vector<1x8x16xbf16>
    %10 = vector.shape_cast %9 : vector<1x8x16xbf16> to vector<8x16xbf16>
    %cst_8 = arith.constant dense<0.000000e+00> : vector<32x4x16xf32>
    %11 = tpu.matmul %8, %10, %cst_8 {dimension_numbers = #tpu.dot_dimension_numbers<[2], [0], [0, 1], [1], [0, 0, 0, 1, 1, 1], [], []>} : vector<32x4x8xbf16>, vector<8x16xbf16>, vector<32x4x16xf32> -> vector<32x4x16xf32>
    %12 = arith.addf %7, %11 : vector<32x4x16xf32>
    %13 = vector.extract_strided_slice %1 {offsets = [0, 2, 0], sizes = [32, 4, 8], strides = [1, 1, 1]} : vector<32x8x8xbf16> to vector<32x4x8xbf16>
    %c2 = arith.constant 2 : index
    %c0_9 = arith.constant 0 : index
    %c0_10 = arith.constant 0 : index
    %14 = vector.load %arg2[%c2, %c0_9, %c0_10] : memref<5x8x16xbf16, #tpu.memory_space<vmem>>, vector<1x8x16xbf16>
    %15 = vector.shape_cast %14 : vector<1x8x16xbf16> to vector<8x16xbf16>
    %cst_11 = arith.constant dense<0.000000e+00> : vector<32x4x16xf32>
    %16 = tpu.matmul %13, %15, %cst_11 {dimension_numbers = #tpu.dot_dimension_numbers<[2], [0], [0, 1], [1], [0, 0, 0, 1, 1, 1], [], []>} : vector<32x4x8xbf16>, vector<8x16xbf16>, vector<32x4x16xf32> -> vector<32x4x16xf32>
    %17 = arith.addf %12, %16 : vector<32x4x16xf32>
    %18 = vector.extract_strided_slice %1 {offsets = [0, 3, 0], sizes = [32, 4, 8], strides = [1, 1, 1]} : vector<32x8x8xbf16> to vector<32x4x8xbf16>
    %c3 = arith.constant 3 : index
    %c0_12 = arith.constant 0 : index
    %c0_13 = arith.constant 0 : index
    %19 = vector.load %arg2[%c3, %c0_12, %c0_13] : memref<5x8x16xbf16, #tpu.memory_space<vmem>>, vector<1x8x16xbf16>
    %20 = vector.shape_cast %19 : vector<1x8x16xbf16> to vector<8x16xbf16>
    %cst_14 = arith.constant dense<0.000000e+00> : vector<32x4x16xf32>
    %21 = tpu.matmul %18, %20, %cst_14 {dimension_numbers = #tpu.dot_dimension_numbers<[2], [0], [0, 1], [1], [0, 0, 0, 1, 1, 1], [], []>} : vector<32x4x8xbf16>, vector<8x16xbf16>, vector<32x4x16xf32> -> vector<32x4x16xf32>
    %22 = arith.addf %17, %21 : vector<32x4x16xf32>
    %23 = vector.extract_strided_slice %1 {offsets = [0, 4, 0], sizes = [32, 4, 8], strides = [1, 1, 1]} : vector<32x8x8xbf16> to vector<32x4x8xbf16>
    %c4 = arith.constant 4 : index
    %c0_15 = arith.constant 0 : index
    %c0_16 = arith.constant 0 : index
    %24 = vector.load %arg2[%c4, %c0_15, %c0_16] : memref<5x8x16xbf16, #tpu.memory_space<vmem>>, vector<1x8x16xbf16>
    %25 = vector.shape_cast %24 : vector<1x8x16xbf16> to vector<8x16xbf16>
    %cst_17 = arith.constant dense<0.000000e+00> : vector<32x4x16xf32>
    %26 = tpu.matmul %23, %25, %cst_17 {dimension_numbers = #tpu.dot_dimension_numbers<[2], [0], [0, 1], [1], [0, 0, 0, 1, 1, 1], [], []>} : vector<32x4x8xbf16>, vector<8x16xbf16>, vector<32x4x16xf32> -> vector<32x4x16xf32>
    %27 = arith.addf %22, %26 : vector<32x4x16xf32>
    %c0_18 = arith.constant 0 : index
    %c0_19 = arith.constant 0 : index
    %28 = vector.load %arg3[%c0_18, %c0_19] : memref<1x16xf32, #tpu.memory_space<vmem>>, vector<1x16xf32>
    %29 = vector.shape_cast %28 : vector<1x16xf32> to vector<1x1x16xf32>
    %30 = vector.broadcast %29 : vector<1x1x16xf32> to vector<32x4x16xf32>
    %31 = arith.addf %27, %30 : vector<32x4x16xf32>
    %cst_20 = arith.constant dense<0xFF800000> : vector<32x16xf32>
    %32 = vector.multi_reduction <maximumf>, %31, %cst_20 [1] : vector<32x4x16xf32> to vector<32x16xf32>
    %c0_21 = arith.constant 0 : index
    %c0_22 = arith.constant 0 : index
    %33 = vector.load %arg4[%c0_21, %c0_22] : memref<32x16xf32, #tpu.memory_space<vmem>>, vector<32x16xf32>
    tpu.vector_store %arg4[%c0_21, %c0_22], %32 {strides = array<i32>} : memref<32x16xf32, #tpu.memory_space<vmem>>, vector<32x16xf32>,
    return
  }
  func.func @transform_0(%arg0: i32) -> (i32, i32, i32) {
    %c0_i32 = arith.constant 0 : i32
    %c0_i32_0 = arith.constant 0 : i32
    %c0_i32_1 = arith.constant 0 : i32
    return %arg0, %c0_i32, %c0_i32_0 : i32, i32, i32
  }
  func.func @transform_1(%arg0: i32) -> (i32, i32, i32) {
    %c0_i32 = arith.constant 0 : i32
    %c0_i32_0 = arith.constant 0 : i32
    %c0_i32_1 = arith.constant 0 : i32
    %c0_i32_2 = arith.constant 0 : i32
    return %c0_i32, %c0_i32_0, %c0_i32_1 : i32, i32, i32
  }
  func.func @transform_2(%arg0: i32) -> (i32, i32) {
    %c0_i32 = arith.constant 0 : i32
    %c0_i32_0 = arith.constant 0 : i32
    %c0_i32_1 = arith.constant 0 : i32
    return %c0_i32, %c0_i32_0 : i32, i32
  }
  func.func @transform_3(%arg0: i32) -> (i32, i32) {
    %c0_i32 = arith.constant 0 : i32
    %c0_i32_0 = arith.constant 0 : i32
    return %arg0, %c0_i32 : i32, i32
  }
}

</mosaic_0001>

<llo_original>
// kernel: tpu_custom_call.1
$region0: #{tpu_custom_call.1}
  #allocation0 [shape = 'u32[]', space=smem, size = 0x4, offset = 0x4, fixed_abs, tag = 'smem constant byte address 0x4 - core index']
  #allocation1 [shape = 'u32[144,128]{1,0:T(1,128)}', space=vmem, size = 0x12000, scoped, tag = 'internal scratch']
  %s0 = inlined_call_operand.vmem [shape: f32[32,8,8], index: 0, kind: input, shape index: {}]
  %s1 = inlined_call_operand.vmem [shape: bf16[5,8,16], index: 1, kind: input, shape index: {}]
  %s2 = inlined_call_operand.vmem [shape: f32[1,16], index: 2, kind: input, shape index: {}]
  %s3 = inlined_call_operand.vmem [shape: f32[32,16], index: 3, kind: output, shape index: {}]
  %s4 = sld [smem:[#allocation0]]
  $region22: #{tpu_custom_call.1} parent=0
    _
  %s6 = ssub.s32 1, %s4
  %s7 = scalar_select 0, %s6, %s4
  // Predicated region
  $region2: #{tpu_custom_call.1} parent=0 // pred_check
    _
  $region3: #{tpu_custom_call.1} parent=0 // pred_check_branch
    %9 = sbr.rel (0) target = $region5
  $region4: #{tpu_custom_call.1} parent=0 // pred_region
    _
  $region5: #{tpu_custom_call.1} parent=0 // pred_fallthru
    _
  // Predicated region
  $region6: #{tpu_custom_call.1} parent=0 // pred_check
    _
  $region7: #{tpu_custom_call.1} parent=0 // pred_check_branch
    %11 = sbr.rel (0) target = $region9
  $region8: #{tpu_custom_call.1} parent=0 // pred_region
    _
  $region9: #{tpu_custom_call.1} parent=0 // pred_fallthru
    _
  // Predicated region
  $region10: #{tpu_custom_call.1} parent=0 // pred_check
    _
  $region11: #{tpu_custom_call.1} parent=0 // pred_check_branch
    %13 = sbr.rel (0) target = $region13
  $region12: #{tpu_custom_call.1} parent=0 // pred_region
    _
  $region13: #{tpu_custom_call.1} parent=0 // pred_fallthru
    _
  %v15 = vld [vmem:[%s0] sm:$0xff]
  %v16 = vld [vmem:[%s0 + $0x8] sm:$0xff]
  %v17 = vld [vmem:[%s0 + $0x10] sm:$0xff]
  %v18 = vld [vmem:[%s0 + $0x18] sm:$0xff]
  %v19 = vld [vmem:[%s0 + $0x20] sm:$0xff]
  %v20 = vld [vmem:[%s0 + $0x28] sm:$0xff]
  %v21 = vld [vmem:[%s0 + $0x30] sm:$0xff]
  %v22 = vld [vmem:[%s0 + $0x38] sm:$0xff]
  %v23 = vld [vmem:[%s0 + $0x40] sm:$0xff]
  %v24 = vld [vmem:[%s0 + $0x48] sm:$0xff]
  %v25 = vld [vmem:[%s0 + $0x50] sm:$0xff]
  %v26 = vld [vmem:[%s0 + $0x58] sm:$0xff]
  %v27 = vld [vmem:[%s0 + $0x60] sm:$0xff]
  %v28 = vld [vmem:[%s0 + $0x68] sm:$0xff]
  %v29 = vld [vmem:[%s0 + $0x70] sm:$0xff]
  %v30 = vld [vmem:[%s0 + $0x78] sm:$0xff]
  %v31 = vld [vmem:[%s0 + $0x80] sm:$0xff]
  %v32 = vld [vmem:[%s0 + $0x88] sm:$0xff]
  %v33 = vld [vmem:[%s0 + $0x90] sm:$0xff]
  %v34 = vld [vmem:[%s0 + $0x98] sm:$0xff]
  %v35 = vld [vmem:[%s0 + $0xa0] sm:$0xff]
  %v36 = vld [vmem:[%s0 + $0xa8] sm:$0xff]
  %v37 = vld [vmem:[%s0 + $0xb0] sm:$0xff]
  %v38 = vld [vmem:[%s0 + $0xb8] sm:$0xff]
  %v39 = vld [vmem:[%s0 + $0xc0] sm:$0xff]
  %v40 = vld [vmem:[%s0 + $0xc8] sm:$0xff]
  %v41 = vld [vmem:[%s0 + $0xd0] sm:$0xff]
  %v42 = vld [vmem:[%s0 + $0xd8] sm:$0xff]
  %v43 = vld [vmem:[%s0 + $0xe0] sm:$0xff]
  %v44 = vld [vmem:[%s0 + $0xe8] sm:$0xff]
  %v45 = vld [vmem:[%s0 + $0xf0] sm:$0xff]
  %v46 = vld [vmem:[%s0 + $0xf8] sm:$0xff]
  %v47 = vpack.c.bf16 %v15, %v15
  %v48 = vpack.c.bf16 %v16, %v16
  %v49 = vpack.c.bf16 %v17, %v17
  %v50 = vpack.c.bf16 %v18, %v18
  %v51 = vpack.c.bf16 %v19, %v19
  %v52 = vpack.c.bf16 %v20, %v20
  %v53 = vpack.c.bf16 %v21, %v21
  %v54 = vpack.c.bf16 %v22, %v22
  %v55 = vpack.c.bf16 %v23, %v23
  %v56 = vpack.c.bf16 %v24, %v24
  %v57 = vpack.c.bf16 %v25, %v25
  %v58 = vpack.c.bf16 %v26, %v26
  %v59 = vpack.c.bf16 %v27, %v27
  %v60 = vpack.c.bf16 %v28, %v28
  %v61 = vpack.c.bf16 %v29, %v29
  %v62 = vpack.c.bf16 %v30, %v30
  %v63 = vpack.c.bf16 %v31, %v31
  %v64 = vpack.c.bf16 %v32, %v32
  %v65 = vpack.c.bf16 %v33, %v33
  %v66 = vpack.c.bf16 %v34, %v34
  %v67 = vpack.c.bf16 %v35, %v35
  %v68 = vpack.c.bf16 %v36, %v36
  %v69 = vpack.c.bf16 %v37, %v37
  %v70 = vpack.c.bf16 %v38, %v38
  %v71 = vpack.c.bf16 %v39, %v39
  %v72 = vpack.c.bf16 %v40, %v40
  %v73 = vpack.c.bf16 %v41, %v41
  %v74 = vpack.c.bf16 %v42, %v42
  %v75 = vpack.c.bf16 %v43, %v43
  %v76 = vpack.c.bf16 %v44, %v44
  %v77 = vpack.c.bf16 %v45, %v45
  %v78 = vpack.c.bf16 %v46, %v46
  %v79 = vld [vmem:[%s1] sm:$0xf]
  %s80 = scalar_lea.vmem %s1, 4
  %v81 = vld [vmem:[%s80] sm:$0xf]
  %v115 = vunpack.c.l.s4 1983009808
  %v116 = vunpack.c.0.s8 %v115
  %v117 = vlaneseq
  %v118 = vshrl.u32 %v117, 7
  %v119 = vsub.s32 %v116, %v118
  %v120 = vrot.slane %v47, %v119
  %v121 = vcombine.high %v120, %v120
  %v123 = vunpack.c.l.s4 1983009808
  %v124 = vunpack.c.0.s8 %v123
  %v125 = vlaneseq
  %v126 = vshrl.u32 %v125, 7
  %v127 = vsub.s32 %v124, %v126
  %v128 = vrot.slane %v48, %v127
  %v129 = vcombine.high %v128, %v128
  %v131 = vunpack.c.l.s4 1983009808
  %v132 = vunpack.c.0.s8 %v131
  %v133 = vlaneseq
  %v134 = vshrl.u32 %v133, 7
  %v135 = vsub.s32 %v132, %v134
  %v136 = vrot.slane %v49, %v135
  %v137 = vcombine.high %v136, %v136
  %v139 = vunpack.c.l.s4 1983009808
  %v140 = vunpack.c.0.s8 %v139
  %v141 = vlaneseq
  %v142 = vshrl.u32 %v141, 7
  %v143 = vsub.s32 %v140, %v142
  %v144 = vrot.slane %v50, %v143
  %v145 = vcombine.high %v144, %v144
  %v147 = vunpack.c.l.s4 1983009808
  %v148 = vunpack.c.0.s8 %v147
  %v149 = vlaneseq
  %v150 = vshrl.u32 %v149, 7
  %v151 = vsub.s32 %v148, %v150
  %v152 = vrot.slane %v51, %v151
  %v153 = vcombine.high %v152, %v152
  %v155 = vunpack.c.l.s4 1983009808
  %v156 = vunpack.c.0.s8 %v155
  %v157 = vlaneseq
  %v158 = vshrl.u32 %v157, 7
  %v159 = vsub.s32 %v156, %v158
  %v160 = vrot.slane %v52, %v159
  %v161 = vcombine.high %v160, %v160
  %v163 = vunpack.c.l.s4 1983009808
  %v164 = vunpack.c.0.s8 %v163
  %v165 = vlaneseq
  %v166 = vshrl.u32 %v165, 7
  %v167 = vsub.s32 %v164, %v166
  %v168 = vrot.slane %v53, %v167
  %v169 = vcombine.high %v168, %v168
  %v171 = vunpack.c.l.s4 1983009808
  %v172 = vunpack.c.0.s8 %v171
  %v173 = vlaneseq
  %v174 = vshrl.u32 %v173, 7
  %v175 = vsub.s32 %v172, %v174
  %v176 = vrot.slane %v54, %v175
  %v177 = vcombine.high %v176, %v176
  %v179 = vunpack.c.l.s4 1983009808
  %v180 = vunpack.c.0.s8 %v179
  %v181 = vlaneseq
  %v182 = vshrl.u32 %v181, 7
  %v183 = vsub.s32 %v180, %v182
  %v184 = vrot.slane %v55, %v183
  %v185 = vcombine.high %v184, %v184
  %v187 = vunpack.c.l.s4 1983009808
  %v188 = vunpack.c.0.s8 %v187
  %v189 = vlaneseq
  %v190 = vshrl.u32 %v189, 7
  %v191 = vsub.s32 %v188, %v190
  %v192 = vrot.slane %v56, %v191
  %v193 = vcombine.high %v192, %v192
  %v195 = vunpack.c.l.s4 1983009808
  %v196 = vunpack.c.0.s8 %v195
  %v197 = vlaneseq
  %v198 = vshrl.u32 %v197, 7
  %v199 = vsub.s32 %v196, %v198
  %v200 = vrot.slane %v57, %v199
  %v201 = vcombine.high %v200, %v200
  %v203 = vunpack.c.l.s4 1983009808
  %v204 = vunpack.c.0.s8 %v203
  %v205 = vlaneseq
  %v206 = vshrl.u32 %v205, 7
  %v207 = vsub.s32 %v204, %v206
  %v208 = vrot.slane %v58, %v207
  %v209 = vcombine.high %v208, %v208
  %v211 = vunpack.c.l.s4 1983009808
  %v212 = vunpack.c.0.s8 %v211
  %v213 = vlaneseq
  %v214 = vshrl.u32 %v213, 7
  %v215 = vsub.s32 %v212, %v214
  %v216 = vrot.slane %v59, %v215
  %v217 = vcombine.high %v216, %v216
  %v219 = vunpack.c.l.s4 1983009808
  %v220 = vunpack.c.0.s8 %v219
  %v221 = vlaneseq
  %v222 = vshrl.u32 %v221, 7
  %v223 = vsub.s32 %v220, %v222
  %v224 = vrot.slane %v60, %v223
  %v225 = vcombine.high %v224, %v224
  %v227 = vunpack.c.l.s4 1983009808
  %v228 = vunpack.c.0.s8 %v227
  %v229 = vlaneseq
  %v230 = vshrl.u32 %v229, 7
  %v231 = vsub.s32 %v228, %v230
  %v232 = vrot.slane %v61, %v231
  %v233 = vcombine.high %v232, %v232
  %v235 = vunpack.c.l.s4 1983009808
  %v236 = vunpack.c.0.s8 %v235
  %v237 = vlaneseq
  %v238 = vshrl.u32 %v237, 7
  %v239 = vsub.s32 %v236, %v238
  %v240 = vrot.slane %v62, %v239
  %v241 = vcombine.high %v240, %v240
  %v243 = vunpack.c.l.s4 1983009808
  %v244 = vunpack.c.0.s8 %v243
  %v245 = vlaneseq
  %v246 = vshrl.u32 %v245, 7
  %v247 = vsub.s32 %v244, %v246
  %v248 = vrot.slane %v63, %v247
  %v249 = vcombine.high %v248, %v248
  %v251 = vunpack.c.l.s4 1983009808
  %v252 = vunpack.c.0.s8 %v251
  %v253 = vlaneseq
  %v254 = vshrl.u32 %v253, 7
  %v255 = vsub.s32 %v252, %v254
  %v256 = vrot.slane %v64, %v255
  %v257 = vcombine.high %v256, %v256
  %v259 = vunpack.c.l.s4 1983009808
  %v260 = vunpack.c.0.s8 %v259
  %v261 = vlaneseq
  %v262 = vshrl.u32 %v261, 7
  %v263 = vsub.s32 %v260, %v262
  %v264 = vrot.slane %v65, %v263
  %v265 = vcombine.high %v264, %v264
  %v267 = vunpack.c.l.s4 1983009808
  %v268 = vunpack.c.0.s8 %v267
  %v269 = vlaneseq
  %v270 = vshrl.u32 %v269, 7
  %v271 = vsub.s32 %v268, %v270
  %v272 = vrot.slane %v66, %v271
  %v273 = vcombine.high %v272, %v272
  %v275 = vunpack.c.l.s4 1983009808
  %v276 = vunpack.c.0.s8 %v275
  %v277 = vlaneseq
  %v278 = vshrl.u32 %v277, 7
  %v279 = vsub.s32 %v276, %v278
  %v280 = vrot.slane %v67, %v279
  %v281 = vcombine.high %v280, %v280
  %v283 = vunpack.c.l.s4 1983009808
  %v284 = vunpack.c.0.s8 %v283
  %v285 = vlaneseq
  %v286 = vshrl.u32 %v285, 7
  %v287 = vsub.s32 %v284, %v286
  %v288 = vrot.slane %v68, %v287
  %v289 = vcombine.high %v288, %v288
  %v291 = vunpack.c.l.s4 1983009808
  %v292 = vunpack.c.0.s8 %v291
  %v293 = vlaneseq
  %v294 = vshrl.u32 %v293, 7
  %v295 = vsub.s32 %v292, %v294
  %v296 = vrot.slane %v69, %v295
  %v297 = vcombine.high %v296, %v296
  %v299 = vunpack.c.l.s4 1983009808
  %v300 = vunpack.c.0.s8 %v299
  %v301 = vlaneseq
  %v302 = vshrl.u32 %v301, 7
  %v303 = vsub.s32 %v300, %v302
  %v304 = vrot.slane %v70, %v303
  %v305 = vcombine.high %v304, %v304
  %v307 = vunpack.c.l.s4 1983009808
  %v308 = vunpack.c.0.s8 %v307
  %v309 = vlaneseq
  %v310 = vshrl.u32 %v309, 7
  %v311 = vsub.s32 %v308, %v310
  %v312 = vrot.slane %v71, %v311
  %v313 = vcombine.high %v312, %v312
  %v315 = vunpack.c.l.s4 1983009808
  %v316 = vunpack.c.0.s8 %v315
  %v317 = vlaneseq
  %v318 = vshrl.u32 %v317, 7
  %v319 = vsub.s32 %v316, %v318
  %v320 = vrot.slane %v72, %v319
  %v321 = vcombine.high %v320, %v320
  %v323 = vunpack.c.l.s4 1983009808
  %v324 = vunpack.c.0.s8 %v323
  %v325 = vlaneseq
  %v326 = vshrl.u32 %v325, 7
  %v327 = vsub.s32 %v324, %v326
  %v328 = vrot.slane %v73, %v327
  %v329 = vcombine.high %v328, %v328
  %v331 = vunpack.c.l.s4 1983009808
  %v332 = vunpack.c.0.s8 %v331
  %v333 = vlaneseq
  %v334 = vshrl.u32 %v333, 7
  %v335 = vsub.s32 %v332, %v334
  %v336 = vrot.slane %v74, %v335
  %v337 = vcombine.high %v336, %v336
  %v339 = vunpack.c.l.s4 1983009808
  %v340 = vunpack.c.0.s8 %v339
  %v341 = vlaneseq
  %v342 = vshrl.u32 %v341, 7
  %v343 = vsub.s32 %v340, %v342
  %v344 = vrot.slane %v75, %v343
  %v345 = vcombine.high %v344, %v344
  %v347 = vunpack.c.l.s4 1983009808
  %v348 = vunpack.c.0.s8 %v347
  %v349 = vlaneseq
  %v350 = vshrl.u32 %v349, 7
  %v351 = vsub.s32 %v348, %v350
  %v352 = vrot.slane %v76, %v351
  %v353 = vcombine.high %v352, %v352
  %v355 = vunpack.c.l.s4 1983009808
  %v356 = vunpack.c.0.s8 %v355
  %v357 = vlaneseq
  %v358 = vshrl.u32 %v357, 7
  %v359 = vsub.s32 %v356, %v358
  %v360 = vrot.slane %v77, %v359
  %v361 = vcombine.high %v360, %v360
  %v363 = vunpack.c.l.s4 1983009808
  %v364 = vunpack.c.0.s8 %v363
  %v365 = vlaneseq
  %v366 = vshrl.u32 %v365, 7
  %v367 = vsub.s32 %v364, %v366
  %v368 = vrot.slane %v78, %v367
  %v369 = vcombine.high %v368, %v368
  %vm370 = vsmask.f32 1280
  %vm371 = vsmask.f32 3336
  %vm372 = vmor %vm370, %vm371
  %vm373 = vsmask.f32 5392
  %vm374 = vmor %vm372, %vm373
  %vm375 = vsmask.f32 7448
  %vm376 = vmor %vm374, %vm375
  %v378 = vshrl.u32 %v120, 16
  %v380 = vrot.slane %v378, 6
  %v381 = vshll.u32 %v120, 16
  %v383 = vrot.slane %v381, 7
  %v384 = vor.u32 %v380, %v383
  %v385 = vrot.slane %v384, 2
  %v387 = vshll.u32 %v121, 16
  %v389 = vrot.slane %v387, 7
  %v390 = vsel %vm376, %v385, %v389
  %v392 = vshrl.u32 %v128, 16
  %v394 = vrot.slane %v392, 6
  %v395 = vshll.u32 %v128, 16
  %v397 = vrot.slane %v395, 7
  %v398 = vor.u32 %v394, %v397
  %v399 = vrot.slane %v398, 2
  %v401 = vshll.u32 %v129, 16
  %v403 = vrot.slane %v401, 7
  %v404 = vsel %vm376, %v399, %v403
  %v406 = vshrl.u32 %v136, 16
  %v408 = vrot.slane %v406, 6
  %v409 = vshll.u32 %v136, 16
  %v411 = vrot.slane %v409, 7
  %v412 = vor.u32 %v408, %v411
  %v413 = vrot.slane %v412, 2
  %v415 = vshll.u32 %v137, 16
  %v417 = vrot.slane %v415, 7
  %v418 = vsel %vm376, %v413, %v417
  %v420 = vshrl.u32 %v144, 16
  %v422 = vrot.slane %v420, 6
  %v423 = vshll.u32 %v144, 16
  %v425 = vrot.slane %v423, 7
  %v426 = vor.u32 %v422, %v425
  %v427 = vrot.slane %v426, 2
  %v429 = vshll.u32 %v145, 16
  %v431 = vrot.slane %v429, 7
  %v432 = vsel %vm376, %v427, %v431
  %v434 = vshrl.u32 %v152, 16
  %v436 = vrot.slane %v434, 6
  %v437 = vshll.u32 %v152, 16
  %v439 = vrot.slane %v437, 7
  %v440 = vor.u32 %v436, %v439
  %v441 = vrot.slane %v440, 2
  %v443 = vshll.u32 %v153, 16
  %v445 = vrot.slane %v443, 7
  %v446 = vsel %vm376, %v441, %v445
  %v448 = vshrl.u32 %v160, 16
  %v450 = vrot.slane %v448, 6
  %v451 = vshll.u32 %v160, 16
  %v453 = vrot.slane %v451, 7
  %v454 = vor.u32 %v450, %v453
  %v455 = vrot.slane %v454, 2
  %v457 = vshll.u32 %v161, 16
  %v459 = vrot.slane %v457, 7
  %v460 = vsel %vm376, %v455, %v459
  %v462 = vshrl.u32 %v168, 16
  %v464 = vrot.slane %v462, 6
  %v465 = vshll.u32 %v168, 16
  %v467 = vrot.slane %v465, 7
  %v468 = vor.u32 %v464, %v467
  %v469 = vrot.slane %v468, 2
  %v471 = vshll.u32 %v169, 16
  %v473 = vrot.slane %v471, 7
  %v474 = vsel %vm376, %v469, %v473
  %v476 = vshrl.u32 %v176, 16
  %v478 = vrot.slane %v476, 6
  %v479 = vshll.u32 %v176, 16
  %v481 = vrot.slane %v479, 7
  %v482 = vor.u32 %v478, %v481
  %v483 = vrot.slane %v482, 2
  %v485 = vshll.u32 %v177, 16
  %v487 = vrot.slane %v485, 7
  %v488 = vsel %vm376, %v483, %v487
  %v490 = vshrl.u32 %v184, 16
  %v492 = vrot.slane %v490, 6
  %v493 = vshll.u32 %v184, 16
  %v495 = vrot.slane %v493, 7
  %v496 = vor.u32 %v492, %v495
  %v497 = vrot.slane %v496, 2
  %v499 = vshll.u32 %v185, 16
  %v501 = vrot.slane %v499, 7
  %v502 = vsel %vm376, %v497, %v501
  %v504 = vshrl.u32 %v192, 16
  %v506 = vrot.slane %v504, 6
  %v507 = vshll.u32 %v192, 16
  %v509 = vrot.slane %v507, 7
  %v510 = vor.u32 %v506, %v509
  %v511 = vrot.slane %v510, 2
  %v513 = vshll.u32 %v193, 16
  %v515 = vrot.slane %v513, 7
  %v516 = vsel %vm376, %v511, %v515
  %v518 = vshrl.u32 %v200, 16
  %v520 = vrot.slane %v518, 6
  %v521 = vshll.u32 %v200, 16
  %v523 = vrot.slane %v521, 7
  %v524 = vor.u32 %v520, %v523
  %v525 = vrot.slane %v524, 2
  %v527 = vshll.u32 %v201, 16
  %v529 = vrot.slane %v527, 7
  %v530 = vsel %vm376, %v525, %v529
  %v532 = vshrl.u32 %v208, 16
  %v534 = vrot.slane %v532, 6
  %v535 = vshll.u32 %v208, 16
  %v537 = vrot.slane %v535, 7
  %v538 = vor.u32 %v534, %v537
  %v539 = vrot.slane %v538, 2
  %v541 = vshll.u32 %v209, 16
  %v543 = vrot.slane %v541, 7
  %v544 = vsel %vm376, %v539, %v543
  %v546 = vshrl.u32 %v216, 16
  %v548 = vrot.slane %v546, 6
  %v549 = vshll.u32 %v216, 16
  %v551 = vrot.slane %v549, 7
  %v552 = vor.u32 %v548, %v551
  %v553 = vrot.slane %v552, 2
  %v555 = vshll.u32 %v217, 16
  %v557 = vrot.slane %v555, 7
  %v558 = vsel %vm376, %v553, %v557
  %v560 = vshrl.u32 %v224, 16
  %v562 = vrot.slane %v560, 6
  %v563 = vshll.u32 %v224, 16
  %v565 = vrot.slane %v563, 7
  %v566 = vor.u32 %v562, %v565
  %v567 = vrot.slane %v566, 2
  %v569 = vshll.u32 %v225, 16
  %v571 = vrot.slane %v569, 7
  %v572 = vsel %vm376, %v567, %v571
  %v574 = vshrl.u32 %v232, 16
  %v576 = vrot.slane %v574, 6
  %v577 = vshll.u32 %v232, 16
  %v579 = vrot.slane %v577, 7
  %v580 = vor.u32 %v576, %v579
  %v581 = vrot.slane %v580, 2
  %v583 = vshll.u32 %v233, 16
  %v585 = vrot.slane %v583, 7
  %v586 = vsel %vm376, %v581, %v585
  %v588 = vshrl.u32 %v240, 16
  %v590 = vrot.slane %v588, 6
  %v591 = vshll.u32 %v240, 16
  %v593 = vrot.slane %v591, 7
  %v594 = vor.u32 %v590, %v593
  %v595 = vrot.slane %v594, 2
  %v597 = vshll.u32 %v241, 16
  %v599 = vrot.slane %v597, 7
  %v600 = vsel %vm376, %v595, %v599
  %v602 = vshrl.u32 %v248, 16
  %v604 = vrot.slane %v602, 6
  %v605 = vshll.u32 %v248, 16
  %v607 = vrot.slane %v605, 7
  %v608 = vor.u32 %v604, %v607
  %v609 = vrot.slane %v608, 2
  %v611 = vshll.u32 %v249, 16
  %v613 = vrot.slane %v611, 7
  %v614 = vsel %vm376, %v609, %v613
  %v616 = vshrl.u32 %v256, 16
  %v618 = vrot.slane %v616, 6
  %v619 = vshll.u32 %v256, 16
  %v621 = vrot.slane %v619, 7
  %v622 = vor.u32 %v618, %v621
  %v623 = vrot.slane %v622, 2
  %v625 = vshll.u32 %v257, 16
  %v627 = vrot.slane %v625, 7
  %v628 = vsel %vm376, %v623, %v627
  %v630 = vshrl.u32 %v264, 16
  %v632 = vrot.slane %v630, 6
  %v633 = vshll.u32 %v264, 16
  %v635 = vrot.slane %v633, 7
  %v636 = vor.u32 %v632, %v635
  %v637 = vrot.slane %v636, 2
  %v639 = vshll.u32 %v265, 16
  %v641 = vrot.slane %v639, 7
  %v642 = vsel %vm376, %v637, %v641
  %v644 = vshrl.u32 %v272, 16
  %v646 = vrot.slane %v644, 6
  %v647 = vshll.u32 %v272, 16
  %v649 = vrot.slane %v647, 7
  %v650 = vor.u32 %v646, %v649
  %v651 = vrot.slane %v650, 2
  %v653 = vshll.u32 %v273, 16
  %v655 = vrot.slane %v653, 7
  %v656 = vsel %vm376, %v651, %v655
  %v658 = vshrl.u32 %v280, 16
  %v660 = vrot.slane %v658, 6
  %v661 = vshll.u32 %v280, 16
  %v663 = vrot.slane %v661, 7
  %v664 = vor.u32 %v660, %v663
  %v665 = vrot.slane %v664, 2
  %v667 = vshll.u32 %v281, 16
  %v669 = vrot.slane %v667, 7
  %v670 = vsel %vm376, %v665, %v669
  %v672 = vshrl.u32 %v288, 16
  %v674 = vrot.slane %v672, 6
  %v675 = vshll.u32 %v288, 16
  %v677 = vrot.slane %v675, 7
  %v678 = vor.u32 %v674, %v677
  %v679 = vrot.slane %v678, 2
  %v681 = vshll.u32 %v289, 16
  %v683 = vrot.slane %v681, 7
  %v684 = vsel %vm376, %v679, %v683
  %v686 = vshrl.u32 %v296, 16
  %v688 = vrot.slane %v686, 6
  %v689 = vshll.u32 %v296, 16
  %v691 = vrot.slane %v689, 7
  %v692 = vor.u32 %v688, %v691
  %v693 = vrot.slane %v692, 2
  %v695 = vshll.u32 %v297, 16
  %v697 = vrot.slane %v695, 7
  %v698 = vsel %vm376, %v693, %v697
  %v700 = vshrl.u32 %v304, 16
  %v702 = vrot.slane %v700, 6
  %v703 = vshll.u32 %v304, 16
  %v705 = vrot.slane %v703, 7
  %v706 = vor.u32 %v702, %v705
  %v707 = vrot.slane %v706, 2
  %v709 = vshll.u32 %v305, 16
  %v711 = vrot.slane %v709, 7
  %v712 = vsel %vm376, %v707, %v711
  %v714 = vshrl.u32 %v312, 16
  %v716 = vrot.slane %v714, 6
  %v717 = vshll.u32 %v312, 16
  %v719 = vrot.slane %v717, 7
  %v720 = vor.u32 %v716, %v719
  %v721 = vrot.slane %v720, 2
  %v723 = vshll.u32 %v313, 16
  %v725 = vrot.slane %v723, 7
  %v726 = vsel %vm376, %v721, %v725
  %v728 = vshrl.u32 %v320, 16
  %v730 = vrot.slane %v728, 6
  %v731 = vshll.u32 %v320, 16
  %v733 = vrot.slane %v731, 7
  %v734 = vor.u32 %v730, %v733
  %v735 = vrot.slane %v734, 2
  %v737 = vshll.u32 %v321, 16
  %v739 = vrot.slane %v737, 7
  %v740 = vsel %vm376, %v735, %v739
  %v742 = vshrl.u32 %v328, 16
  %v744 = vrot.slane %v742, 6
  %v745 = vshll.u32 %v328, 16
  %v747 = vrot.slane %v745, 7
  %v748 = vor.u32 %v744, %v747
  %v749 = vrot.slane %v748, 2
  %v751 = vshll.u32 %v329, 16
  %v753 = vrot.slane %v751, 7
  %v754 = vsel %vm376, %v749, %v753
  %v756 = vshrl.u32 %v336, 16
  %v758 = vrot.slane %v756, 6
  %v759 = vshll.u32 %v336, 16
  %v761 = vrot.slane %v759, 7
  %v762 = vor.u32 %v758, %v761
  %v763 = vrot.slane %v762, 2
  %v765 = vshll.u32 %v337, 16
  %v767 = vrot.slane %v765, 7
  %v768 = vsel %vm376, %v763, %v767
  %v770 = vshrl.u32 %v344, 16
  %v772 = vrot.slane %v770, 6
  %v773 = vshll.u32 %v344, 16
  %v775 = vrot.slane %v773, 7
  %v776 = vor.u32 %v772, %v775
  %v777 = vrot.slane %v776, 2
  %v779 = vshll.u32 %v345, 16
  %v781 = vrot.slane %v779, 7
  %v782 = vsel %vm376, %v777, %v781
  %v784 = vshrl.u32 %v352, 16
  %v786 = vrot.slane %v784, 6
  %v787 = vshll.u32 %v352, 16
  %v789 = vrot.slane %v787, 7
  %v790 = vor.u32 %v786, %v789
  %v791 = vrot.slane %v790, 2
  %v793 = vshll.u32 %v353, 16
  %v795 = vrot.slane %v793, 7
  %v796 = vsel %vm376, %v791, %v795
  %v798 = vshrl.u32 %v360, 16
  %v800 = vrot.slane %v798, 6
  %v801 = vshll.u32 %v360, 16
  %v803 = vrot.slane %v801, 7
  %v804 = vor.u32 %v800, %v803
  %v805 = vrot.slane %v804, 2
  %v807 = vshll.u32 %v361, 16
  %v809 = vrot.slane %v807, 7
  %v810 = vsel %vm376, %v805, %v809
  %v812 = vshrl.u32 %v368, 16
  %v814 = vrot.slane %v812, 6
  %v815 = vshll.u32 %v368, 16
  %v817 = vrot.slane %v815, 7
  %v818 = vor.u32 %v814, %v817
  %v819 = vrot.slane %v818, 2
  %v821 = vshll.u32 %v369, 16
  %v823 = vrot.slane %v821, 7
  %v824 = vsel %vm376, %v819, %v823
  %v825 = vcombine.low %v390, %v404
  %v826 = vcombine.low %v418, %v432
  %v828 = vunpack.c.l.s4 1983009808
  %v829 = vunpack.c.0.s8 %v828
  %v830 = vlaneseq
  %v831 = vshrl.u32 %v830, 7
  %v832 = vsub.s32 %v829, %v831
  %v833 = vrot.slane %v825, %v832
  %v835 = vunpack.c.l.s4 1983009808
  %v836 = vunpack.c.0.s8 %v835
  %v837 = vlaneseq
  %v838 = vshrl.u32 %v837, 7
  %v839 = vsub.s32 %v836, %v838
  %v840 = vrot.slane %v826, %v839
  %v841 = vcombine.low %v833, %v840
  %v842 = vcombine.low %v446, %v460
  %v843 = vcombine.low %v474, %v488
  %v845 = vunpack.c.l.s4 1983009808
  %v846 = vunpack.c.0.s8 %v845
  %v847 = vlaneseq
  %v848 = vshrl.u32 %v847, 7
  %v849 = vsub.s32 %v846, %v848
  %v850 = vrot.slane %v842, %v849
  %v852 = vunpack.c.l.s4 1983009808
  %v853 = vunpack.c.0.s8 %v852
  %v854 = vlaneseq
  %v855 = vshrl.u32 %v854, 7
  %v856 = vsub.s32 %v853, %v855
  %v857 = vrot.slane %v843, %v856
  %v858 = vcombine.low %v850, %v857
  %v859 = vcombine.low %v502, %v516
  %v860 = vcombine.low %v530, %v544
  %v862 = vunpack.c.l.s4 1983009808
  %v863 = vunpack.c.0.s8 %v862
  %v864 = vlaneseq
  %v865 = vshrl.u32 %v864, 7
  %v866 = vsub.s32 %v863, %v865
  %v867 = vrot.slane %v859, %v866
  %v869 = vunpack.c.l.s4 1983009808
  %v870 = vunpack.c.0.s8 %v869
  %v871 = vlaneseq
  %v872 = vshrl.u32 %v871, 7
  %v873 = vsub.s32 %v870, %v872
  %v874 = vrot.slane %v860, %v873
  %v875 = vcombine.low %v867, %v874
  %v876 = vcombine.low %v558, %v572
  %v877 = vcombine.low %v586, %v600
  %v879 = vunpack.c.l.s4 1983009808
  %v880 = vunpack.c.0.s8 %v879
  %v881 = vlaneseq
  %v882 = vshrl.u32 %v881, 7
  %v883 = vsub.s32 %v880, %v882
  %v884 = vrot.slane %v876, %v883
  %v886 = vunpack.c.l.s4 1983009808
  %v887 = vunpack.c.0.s8 %v886
  %v888 = vlaneseq
  %v889 = vshrl.u32 %v888, 7
  %v890 = vsub.s32 %v887, %v889
  %v891 = vrot.slane %v877, %v890
  %v892 = vcombine.low %v884, %v891
  %v893 = vcombine.low %v614, %v628
  %v894 = vcombine.low %v642, %v656
  %v896 = vunpack.c.l.s4 1983009808
  %v897 = vunpack.c.0.s8 %v896
  %v898 = vlaneseq
  %v899 = vshrl.u32 %v898, 7
  %v900 = vsub.s32 %v897, %v899
  %v901 = vrot.slane %v893, %v900
  %v903 = vunpack.c.l.s4 1983009808
  %v904 = vunpack.c.0.s8 %v903
  %v905 = vlaneseq
  %v906 = vshrl.u32 %v905, 7
  %v907 = vsub.s32 %v904, %v906
  %v908 = vrot.slane %v894, %v907
  %v909 = vcombine.low %v901, %v908
  %v910 = vcombine.low %v670, %v684
  %v911 = vcombine.low %v698, %v712
  %v913 = vunpack.c.l.s4 1983009808
  %v914 = vunpack.c.0.s8 %v913
  %v915 = vlaneseq
  %v916 = vshrl.u32 %v915, 7
  %v917 = vsub.s32 %v914, %v916
  %v918 = vrot.slane %v910, %v917
  %v920 = vunpack.c.l.s4 1983009808
  %v921 = vunpack.c.0.s8 %v920
  %v922 = vlaneseq
  %v923 = vshrl.u32 %v922, 7
  %v924 = vsub.s32 %v921, %v923
  %v925 = vrot.slane %v911, %v924
  %v926 = vcombine.low %v918, %v925
  %v927 = vcombine.low %v726, %v740
  %v928 = vcombine.low %v754, %v768
  %v930 = vunpack.c.l.s4 1983009808
  %v931 = vunpack.c.0.s8 %v930
  %v932 = vlaneseq
  %v933 = vshrl.u32 %v932, 7
  %v934 = vsub.s32 %v931, %v933
  %v935 = vrot.slane %v927, %v934
  %v937 = vunpack.c.l.s4 1983009808
  %v938 = vunpack.c.0.s8 %v937
  %v939 = vlaneseq
  %v940 = vshrl.u32 %v939, 7
  %v941 = vsub.s32 %v938, %v940
  %v942 = vrot.slane %v928, %v941
  %v943 = vcombine.low %v935, %v942
  %v944 = vcombine.low %v782, %v796
  %v945 = vcombine.low %v810, %v824
  %v947 = vunpack.c.l.s4 1983009808
  %v948 = vunpack.c.0.s8 %v947
  %v949 = vlaneseq
  %v950 = vshrl.u32 %v949, 7
  %v951 = vsub.s32 %v948, %v950
  %v952 = vrot.slane %v944, %v951
  %v954 = vunpack.c.l.s4 1983009808
  %v955 = vunpack.c.0.s8 %v954
  %v956 = vlaneseq
  %v957 = vshrl.u32 %v956, 7
  %v958 = vsub.s32 %v955, %v957
  %v959 = vrot.slane %v945, %v958
  %v960 = vcombine.low %v952, %v959
  %vm961 = vcmask 64512
  %v963 = vsel %vm961, %v841, 0
  %v966 = vsel %vm961, %v858, 0
  %v969 = vsel %vm961, %v875, 0
  %v972 = vsel %vm961, %v892, 0
  %v975 = vsel %vm961, %v909, 0
  %v978 = vsel %vm961, %v926, 0
  %v981 = vsel %vm961, %v943, 0
  %v984 = vsel %vm961, %v960, 0
  %vm986 = vcmask 1043456
  %v988 = vsel %vm986, %v81, 0
  %990 = vmatprep.subr.bf16.mxu0 0
  %991 = vmatpush1.bf16.msra.mxu0 0
  %992 = vmatprep.subr.bf16.mxu0 0
  %993 = vmatpush1.bf16.msra.mxu0 0
  %994 = vmatprep.subr.bf16.mxu0 0
  %995 = vmatpush1.bf16.msra.mxu0 0
  %996 = vmatprep.subr.bf16.mxu0 0
  %997 = vmatpush1.bf16.msra.mxu0 0
  %998 = vmatprep.subr.bf16.mxu0 0
  %999 = vmatpush1.bf16.msra.mxu0 0
  %1000 = vmatprep.subr.bf16.mxu0 0
  %1001 = vmatpush1.bf16.msra.mxu0 0
  %1002 = vmatprep.subr.bf16.mxu0 0
  %1003 = vmatpush1.bf16.msra.mxu0 0
  %1004 = vmatprep.subr.bf16.mxu0 0
  %1005 = vmatpush1.bf16.msra.mxu0 %v988
  %1006 = vmatprep.subr.bf16.mxu0 0
  %1007 = vmatpush2.bf16.msra.mxu0 0
  %1008 = vmatprep.subr.bf16.mxu0 0
  %1009 = vmatpush2.bf16.msra.mxu0 0
  %1010 = vmatprep.subr.bf16.mxu0 0
  %1011 = vmatpush2.bf16.msra.mxu0 0
  %1012 = vmatprep.subr.bf16.mxu0 0
  %1013 = vmatpush2.bf16.msra.mxu0 0
  %1014 = vmatprep.subr.bf16.mxu0 0
  %1015 = vmatpush2.bf16.msra.mxu0 0
  %1016 = vmatprep.subr.bf16.mxu0 0
  %1017 = vmatpush2.bf16.msra.mxu0 0
  %1018 = vmatprep.subr.bf16.mxu0 0
  %1019 = vmatpush2.bf16.msra.mxu0 0
  %1020 = vmatprep.subr.bf16.mxu0 0
  %1021 = vmatpush2.bf16.msra.mxu0 0
  %1022 = vmatprep.mubr.bf16.mxu0 0
  %1023 = vmatmul.mubr.bf16.gmra.mxu0 %v963
  %v1024 = vpop.f32.mrf.mxu0
  %v1025 = vadd.f32 0.0, %v1024
  %v1026 = vpop.f32.mrf.mxu0
  %v1027 = vpop.f32.mrf.mxu0
  %v1028 = vadd.f32 0.0, %v1027
  %v1029 = vpop.f32.mrf.mxu0
  %1030 = vmatprep.mubr.bf16.mxu0 0
  %1031 = vmatmul.mubr.bf16.gmra.mxu0 %v966
  %v1032 = vpop.f32.mrf.mxu0
  %v1033 = vadd.f32 0.0, %v1032
  %v1034 = vpop.f32.mrf.mxu0
  %v1035 = vpop.f32.mrf.mxu0
  %v1036 = vadd.f32 0.0, %v1035
  %v1037 = vpop.f32.mrf.mxu0
  %1038 = vmatprep.mubr.bf16.mxu0 0
  %1039 = vmatmul.mubr.bf16.gmra.mxu0 %v969
  %v1040 = vpop.f32.mrf.mxu0
  %v1041 = vadd.f32 0.0, %v1040
  %v1042 = vpop.f32.mrf.mxu0
  %v1043 = vpop.f32.mrf.mxu0
  %v1044 = vadd.f32 0.0, %v1043
  %v1045 = vpop.f32.mrf.mxu0
  %1046 = vmatprep.mubr.bf16.mxu0 0
  %1047 = vmatmul.mubr.bf16.gmra.mxu0 %v972
  %v1048 = vpop.f32.mrf.mxu0
  %v1049 = vadd.f32 0.0, %v1048
  %v1050 = vpop.f32.mrf.mxu0
  %v1051 = vpop.f32.mrf.mxu0
  %v1052 = vadd.f32 0.0, %v1051
  %v1053 = vpop.f32.mrf.mxu0
  %1054 = vmatprep.mubr.bf16.mxu0 0
  %1055 = vmatmul.mubr.bf16.gmra.mxu0 %v975
  %v1056 = vpop.f32.mrf.mxu0
  %v1057 = vadd.f32 0.0, %v1056
  %v1058 = vpop.f32.mrf.mxu0
  %v1059 = vpop.f32.mrf.mxu0
  %v1060 = vadd.f32 0.0, %v1059
  %v1061 = vpop.f32.mrf.mxu0
  %1062 = vmatprep.mubr.bf16.mxu0 0
  %1063 = vmatmul.mubr.bf16.gmra.mxu0 %v978
  %v1064 = vpop.f32.mrf.mxu0
  %v1065 = vadd.f32 0.0, %v1064
  %v1066 = vpop.f32.mrf.mxu0
  %v1067 = vpop.f32.mrf.mxu0
  %v1068 = vadd.f32 0.0, %v1067
  %v1069 = vpop.f32.mrf.mxu0
  %1070 = vmatprep.mubr.bf16.mxu0 0
  %1071 = vmatmul.mubr.bf16.gmra.mxu0 %v981
  %v1072 = vpop.f32.mrf.mxu0
  %v1073 = vadd.f32 0.0, %v1072
  %v1074 = vpop.f32.mrf.mxu0
  %v1075 = vpop.f32.mrf.mxu0
  %v1076 = vadd.f32 0.0, %v1075
  %v1077 = vpop.f32.mrf.mxu0
  %1078 = vmatprep.mubr.bf16.mxu0 0
  %1079 = vmatmul.mubr.bf16.gmra.mxu0 %v984
  %v1080 = vpop.f32.mrf.mxu0
  %v1081 = vadd.f32 0.0, %v1080
  %v1082 = vpop.f32.mrf.mxu0
  %v1083 = vpop.f32.mrf.mxu0
  %v1084 = vadd.f32 0.0, %v1083
  %v1085 = vpop.f32.mrf.mxu0
  %1086 = vdwg.mxu0
  %v1087 = vcombine.low %v47, %v48
  %v1088 = vcombine.low %v49, %v50
  %v1090 = vunpack.c.l.s4 1983009808
  %v1091 = vunpack.c.0.s8 %v1090
  %v1092 = vlaneseq
  %v1093 = vshrl.u32 %v1092, 7
  %v1094 = vsub.s32 %v1091, %v1093
  %v1095 = vrot.slane %v1087, %v1094
  %v1097 = vunpack.c.l.s4 1983009808
  %v1098 = vunpack.c.0.s8 %v1097
  %v1099 = vlaneseq
  %v1100 = vshrl.u32 %v1099, 7
  %v1101 = vsub.s32 %v1098, %v1100
  %v1102 = vrot.slane %v1088, %v1101
  %v1103 = vcombine.low %v1095, %v1102
  %v1104 = vcombine.low %v51, %v52
  %v1105 = vcombine.low %v53, %v54
  %v1107 = vunpack.c.l.s4 1983009808
  %v1108 = vunpack.c.0.s8 %v1107
  %v1109 = vlaneseq
  %v1110 = vshrl.u32 %v1109, 7
  %v1111 = vsub.s32 %v1108, %v1110
  %v1112 = vrot.slane %v1104, %v1111
  %v1114 = vunpack.c.l.s4 1983009808
  %v1115 = vunpack.c.0.s8 %v1114
  %v1116 = vlaneseq
  %v1117 = vshrl.u32 %v1116, 7
  %v1118 = vsub.s32 %v1115, %v1117
  %v1119 = vrot.slane %v1105, %v1118
  %v1120 = vcombine.low %v1112, %v1119
  %v1121 = vcombine.low %v55, %v56
  %v1122 = vcombine.low %v57, %v58
  %v1124 = vunpack.c.l.s4 1983009808
  %v1125 = vunpack.c.0.s8 %v1124
  %v1126 = vlaneseq
  %v1127 = vshrl.u32 %v1126, 7
  %v1128 = vsub.s32 %v1125, %v1127
  %v1129 = vrot.slane %v1121, %v1128
  %v1131 = vunpack.c.l.s4 1983009808
  %v1132 = vunpack.c.0.s8 %v1131
  %v1133 = vlaneseq
  %v1134 = vshrl.u32 %v1133, 7
  %v1135 = vsub.s32 %v1132, %v1134
  %v1136 = vrot.slane %v1122, %v1135
  %v1137 = vcombine.low %v1129, %v1136
  %v1138 = vcombine.low %v59, %v60
  %v1139 = vcombine.low %v61, %v62
  %v1141 = vunpack.c.l.s4 1983009808
  %v1142 = vunpack.c.0.s8 %v1141
  %v1143 = vlaneseq
  %v1144 = vshrl.u32 %v1143, 7
  %v1145 = vsub.s32 %v1142, %v1144
  %v1146 = vrot.slane %v1138, %v1145
  %v1148 = vunpack.c.l.s4 1983009808
  %v1149 = vunpack.c.0.s8 %v1148
  %v1150 = vlaneseq
  %v1151 = vshrl.u32 %v1150, 7
  %v1152 = vsub.s32 %v1149, %v1151
  %v1153 = vrot.slane %v1139, %v1152
  %v1154 = vcombine.low %v1146, %v1153
  %v1155 = vcombine.low %v63, %v64
  %v1156 = vcombine.low %v65, %v66
  %v1158 = vunpack.c.l.s4 1983009808
  %v1159 = vunpack.c.0.s8 %v1158
  %v1160 = vlaneseq
  %v1161 = vshrl.u32 %v1160, 7
  %v1162 = vsub.s32 %v1159, %v1161
  %v1163 = vrot.slane %v1155, %v1162
  %v1165 = vunpack.c.l.s4 1983009808
  %v1166 = vunpack.c.0.s8 %v1165
  %v1167 = vlaneseq
  %v1168 = vshrl.u32 %v1167, 7
  %v1169 = vsub.s32 %v1166, %v1168
  %v1170 = vrot.slane %v1156, %v1169
  %v1171 = vcombine.low %v1163, %v1170
  %v1172 = vcombine.low %v67, %v68
  %v1173 = vcombine.low %v69, %v70
  %v1175 = vunpack.c.l.s4 1983009808
  %v1176 = vunpack.c.0.s8 %v1175
  %v1177 = vlaneseq
  %v1178 = vshrl.u32 %v1177, 7
  %v1179 = vsub.s32 %v1176, %v1178
  %v1180 = vrot.slane %v1172, %v1179
  %v1182 = vunpack.c.l.s4 1983009808
  %v1183 = vunpack.c.0.s8 %v1182
  %v1184 = vlaneseq
  %v1185 = vshrl.u32 %v1184, 7
  %v1186 = vsub.s32 %v1183, %v1185
  %v1187 = vrot.slane %v1173, %v1186
  %v1188 = vcombine.low %v1180, %v1187
  %v1189 = vcombine.low %v71, %v72
  %v1190 = vcombine.low %v73, %v74
  %v1192 = vunpack.c.l.s4 1983009808
  %v1193 = vunpack.c.0.s8 %v1192
  %v1194 = vlaneseq
  %v1195 = vshrl.u32 %v1194, 7
  %v1196 = vsub.s32 %v1193, %v1195
  %v1197 = vrot.slane %v1189, %v1196
  %v1199 = vunpack.c.l.s4 1983009808
  %v1200 = vunpack.c.0.s8 %v1199
  %v1201 = vlaneseq
  %v1202 = vshrl.u32 %v1201, 7
  %v1203 = vsub.s32 %v1200, %v1202
  %v1204 = vrot.slane %v1190, %v1203
  %v1205 = vcombine.low %v1197, %v1204
  %v1206 = vcombine.low %v75, %v76
  %v1207 = vcombine.low %v77, %v78
  %v1209 = vunpack.c.l.s4 1983009808
  %v1210 = vunpack.c.0.s8 %v1209
  %v1211 = vlaneseq
  %v1212 = vshrl.u32 %v1211, 7
  %v1213 = vsub.s32 %v1210, %v1212
  %v1214 = vrot.slane %v1206, %v1213
  %v1216 = vunpack.c.l.s4 1983009808
  %v1217 = vunpack.c.0.s8 %v1216
  %v1218 = vlaneseq
  %v1219 = vshrl.u32 %v1218, 7
  %v1220 = vsub.s32 %v1217, %v1219
  %v1221 = vrot.slane %v1207, %v1220
  %v1222 = vcombine.low %v1214, %v1221
  %v1224 = vsel %vm961, %v1103, 0
  %v1227 = vsel %vm961, %v1120, 0
  %v1230 = vsel %vm961, %v1137, 0
  %v1233 = vsel %vm961, %v1154, 0
  %v1236 = vsel %vm961, %v1171, 0
  %v1239 = vsel %vm961, %v1188, 0
  %v1242 = vsel %vm961, %v1205, 0
  %v1245 = vsel %vm961, %v1222, 0
  %v1248 = vsel %vm986, %v79, 0
  %1250 = vmatprep.subr.bf16.mxu0 0
  %1251 = vmatpush1.bf16.msra.mxu0 0
  %1252 = vmatprep.subr.bf16.mxu0 0
  %1253 = vmatpush1.bf16.msra.mxu0 0
  %1254 = vmatprep.subr.bf16.mxu0 0
  %1255 = vmatpush1.bf16.msra.mxu0 0
  %1256 = vmatprep.subr.bf16.mxu0 0
  %1257 = vmatpush1.bf16.msra.mxu0 0
  %1258 = vmatprep.subr.bf16.mxu0 0
  %1259 = vmatpush1.bf16.msra.mxu0 0
  %1260 = vmatprep.subr.bf16.mxu0 0
  %1261 = vmatpush1.bf16.msra.mxu0 0
  %1262 = vmatprep.subr.bf16.mxu0 0
  %1263 = vmatpush1.bf16.msra.mxu0 0
  %1264 = vmatprep.subr.bf16.mxu0 0
  %1265 = vmatpush1.bf16.msra.mxu0 %v1248
  %1266 = vmatprep.subr.bf16.mxu0 0
  %1267 = vmatpush2.bf16.msra.mxu0 0
  %1268 = vmatprep.subr.bf16.mxu0 0
  %1269 = vmatpush2.bf16.msra.mxu0 0
  %1270 = vmatprep.subr.bf16.mxu0 0
  %1271 = vmatpush2.bf16.msra.mxu0 0
  %1272 = vmatprep.subr.bf16.mxu0 0
  %1273 = vmatpush2.bf16.msra.mxu0 0
  %1274 = vmatprep.subr.bf16.mxu0 0
  %1275 = vmatpush2.bf16.msra.mxu0 0
  %1276 = vmatprep.subr.bf16.mxu0 0
  %1277 = vmatpush2.bf16.msra.mxu0 0
  %1278 = vmatprep.subr.bf16.mxu0 0
  %1279 = vmatpush2.bf16.msra.mxu0 0
  %1280 = vmatprep.subr.bf16.mxu0 0
  %1281 = vmatpush2.bf16.msra.mxu0 0
  %1282 = vmatprep.mubr.bf16.mxu0 0
  %1283 = vmatmul.mubr.bf16.gmra.mxu0 %v1224
  %v1284 = vpop.f32.mrf.mxu0
  %v1285 = vadd.f32 %v1025, %v1284
  %v1286 = vpop.f32.mrf.mxu0
  %v1287 = vpop.f32.mrf.mxu0
  %v1288 = vadd.f32 %v1028, %v1287
  %v1289 = vpop.f32.mrf.mxu0
  %1290 = vmatprep.mubr.bf16.mxu0 0
  %1291 = vmatmul.mubr.bf16.gmra.mxu0 %v1227
  %v1292 = vpop.f32.mrf.mxu0
  %v1293 = vadd.f32 %v1033, %v1292
  %v1294 = vpop.f32.mrf.mxu0
  %v1295 = vpop.f32.mrf.mxu0
  %v1296 = vadd.f32 %v1036, %v1295
  %v1297 = vpop.f32.mrf.mxu0
  %1298 = vmatprep.mubr.bf16.mxu0 0
  %1299 = vmatmul.mubr.bf16.gmra.mxu0 %v1230
  %v1300 = vpop.f32.mrf.mxu0
  %v1301 = vadd.f32 %v1041, %v1300
  %v1302 = vpop.f32.mrf.mxu0
  %v1303 = vpop.f32.mrf.mxu0
  %v1304 = vadd.f32 %v1044, %v1303
  %v1305 = vpop.f32.mrf.mxu0
  %1306 = vmatprep.mubr.bf16.mxu0 0
  %1307 = vmatmul.mubr.bf16.gmra.mxu0 %v1233
  %v1308 = vpop.f32.mrf.mxu0
  %v1309 = vadd.f32 %v1049, %v1308
  %v1310 = vpop.f32.mrf.mxu0
  %v1311 = vpop.f32.mrf.mxu0
  %v1312 = vadd.f32 %v1052, %v1311
  %v1313 = vpop.f32.mrf.mxu0
  %1314 = vmatprep.mubr.bf16.mxu0 0
  %1315 = vmatmul.mubr.bf16.gmra.mxu0 %v1236
  %v1316 = vpop.f32.mrf.mxu0
  %v1317 = vadd.f32 %v1057, %v1316
  %v1318 = vpop.f32.mrf.mxu0
  %v1319 = vpop.f32.mrf.mxu0
  %v1320 = vadd.f32 %v1060, %v1319
  %v1321 = vpop.f32.mrf.mxu0
  %1322 = vmatprep.mubr.bf16.mxu0 0
  %1323 = vmatmul.mubr.bf16.gmra.mxu0 %v1239
  %v1324 = vpop.f32.mrf.mxu0
  %v1325 = vadd.f32 %v1065, %v1324
  %v1326 = vpop.f32.mrf.mxu0
  %v1327 = vpop.f32.mrf.mxu0
  %v1328 = vadd.f32 %v1068, %v1327
  %v1329 = vpop.f32.mrf.mxu0
  %1330 = vmatprep.mubr.bf16.mxu0 0
  %1331 = vmatmul.mubr.bf16.gmra.mxu0 %v1242
  %v1332 = vpop.f32.mrf.mxu0
  %v1333 = vadd.f32 %v1073, %v1332
  %v1334 = vpop.f32.mrf.mxu0
  %v1335 = vpop.f32.mrf.mxu0
  %v1336 = vadd.f32 %v1076, %v1335
  %v1337 = vpop.f32.mrf.mxu0
  %1338 = vmatprep.mubr.bf16.mxu0 0
  %1339 = vmatmul.mubr.bf16.gmra.mxu0 %v1245
  %v1340 = vpop.f32.mrf.mxu0
  %v1341 = vadd.f32 %v1081, %v1340
  %v1342 = vpop.f32.mrf.mxu0
  %v1343 = vpop.f32.mrf.mxu0
  %v1344 = vadd.f32 %v1084, %v1343
  %v1345 = vpop.f32.mrf.mxu0
  %1346 = vdwg.mxu0
  %v1363 = vcombine.high %v1285, %v1285
  %v1364 = vcombine.high %v1288, %v1288
  %v1365 = vcombine.high %v1293, %v1293
  %v1366 = vcombine.high %v1296, %v1296
  %v1367 = vcombine.high %v1301, %v1301
  %v1368 = vcombine.high %v1304, %v1304
  %v1369 = vcombine.high %v1309, %v1309
  %v1370 = vcombine.high %v1312, %v1312
  %v1371 = vcombine.high %v1317, %v1317
  %v1372 = vcombine.high %v1320, %v1320
  %v1373 = vcombine.high %v1325, %v1325
  %v1374 = vcombine.high %v1328, %v1328
  %v1375 = vcombine.high %v1333, %v1333
  %v1376 = vcombine.high %v1336, %v1336
  %v1377 = vcombine.high %v1341, %v1341
  %v1378 = vcombine.high %v1344, %v1344
  %s1395 = scalar_lea.vmem %s1, 8
  %v1396 = vld [vmem:[%s1395] sm:$0xf]
  %vm1397 = vcmask 1040384
  %vm1398 = vcmask 1042434
  %vm1399 = vmor %vm1397, %vm1398
  %vm1400 = vcmask 1044484
  %vm1401 = vmor %vm1399, %vm1400
  %vm1402 = vcmask 1046534
  %vm1403 = vmor %vm1401, %vm1402
  %v1404 = vrot.slane %v120, 7
  %v1405 = vrot.slane %v1404, 2
  %v1406 = vrot.slane %v121, 7
  %v1407 = vsel %vm1403, %v1405, %v1406
  %v1408 = vrot.slane %v128, 7
  %v1409 = vrot.slane %v1408, 2
  %v1410 = vrot.slane %v129, 7
  %v1411 = vsel %vm1403, %v1409, %v1410
  %v1412 = vrot.slane %v136, 7
  %v1413 = vrot.slane %v1412, 2
  %v1414 = vrot.slane %v137, 7
  %v1415 = vsel %vm1403, %v1413, %v1414
  %v1416 = vrot.slane %v144, 7
  %v1417 = vrot.slane %v1416, 2
  %v1418 = vrot.slane %v145, 7
  %v1419 = vsel %vm1403, %v1417, %v1418
  %v1420 = vrot.slane %v152, 7
  %v1421 = vrot.slane %v1420, 2
  %v1422 = vrot.slane %v153, 7
  %v1423 = vsel %vm1403, %v1421, %v1422
  %v1424 = vrot.slane %v160, 7
  %v1425 = vrot.slane %v1424, 2
  %v1426 = vrot.slane %v161, 7
  %v1427 = vsel %vm1403, %v1425, %v1426
  %v1428 = vrot.slane %v168, 7
  %v1429 = vrot.slane %v1428, 2
  %v1430 = vrot.slane %v169, 7
  %v1431 = vsel %vm1403, %v1429, %v1430
  %v1432 = vrot.slane %v176, 7
  %v1433 = vrot.slane %v1432, 2
  %v1434 = vrot.slane %v177, 7
  %v1435 = vsel %vm1403, %v1433, %v1434
  %v1436 = vrot.slane %v184, 7
  %v1437 = vrot.slane %v1436, 2
  %v1438 = vrot.slane %v185, 7
  %v1439 = vsel %vm1403, %v1437, %v1438
  %v1440 = vrot.slane %v192, 7
  %v1441 = vrot.slane %v1440, 2
  %v1442 = vrot.slane %v193, 7
  %v1443 = vsel %vm1403, %v1441, %v1442
  %v1444 = vrot.slane %v200, 7
  %v1445 = vrot.slane %v1444, 2
  %v1446 = vrot.slane %v201, 7
  %v1447 = vsel %vm1403, %v1445, %v1446
  %v1448 = vrot.slane %v208, 7
  %v1449 = vrot.slane %v1448, 2
  %v1450 = vrot.slane %v209, 7
  %v1451 = vsel %vm1403, %v1449, %v1450
  %v1452 = vrot.slane %v216, 7
  %v1453 = vrot.slane %v1452, 2
  %v1454 = vrot.slane %v217, 7
  %v1455 = vsel %vm1403, %v1453, %v1454
  %v1456 = vrot.slane %v224, 7
  %v1457 = vrot.slane %v1456, 2
  %v1458 = vrot.slane %v225, 7
  %v1459 = vsel %vm1403, %v1457, %v1458
  %v1460 = vrot.slane %v232, 7
  %v1461 = vrot.slane %v1460, 2
  %v1462 = vrot.slane %v233, 7
  %v1463 = vsel %vm1403, %v1461, %v1462
  %v1464 = vrot.slane %v240, 7
  %v1465 = vrot.slane %v1464, 2
  %v1466 = vrot.slane %v241, 7
  %v1467 = vsel %vm1403, %v1465, %v1466
  %v1468 = vrot.slane %v248, 7
  %v1469 = vrot.slane %v1468, 2
  %v1470 = vrot.slane %v249, 7
  %v1471 = vsel %vm1403, %v1469, %v1470
  %v1472 = vrot.slane %v256, 7
  %v1473 = vrot.slane %v1472, 2
  %v1474 = vrot.slane %v257, 7
  %v1475 = vsel %vm1403, %v1473, %v1474
  %v1476 = vrot.slane %v264, 7
  %v1477 = vrot.slane %v1476, 2
  %v1478 = vrot.slane %v265, 7
  %v1479 = vsel %vm1403, %v1477, %v1478
  %v1480 = vrot.slane %v272, 7
  %v1481 = vrot.slane %v1480, 2
  %v1482 = vrot.slane %v273, 7
  %v1483 = vsel %vm1403, %v1481, %v1482
  %v1484 = vrot.slane %v280, 7
  %v1485 = vrot.slane %v1484, 2
  %v1486 = vrot.slane %v281, 7
  %v1487 = vsel %vm1403, %v1485, %v1486
  %v1488 = vrot.slane %v288, 7
  %v1489 = vrot.slane %v1488, 2
  %v1490 = vrot.slane %v289, 7
  %v1491 = vsel %vm1403, %v1489, %v1490
  %v1492 = vrot.slane %v296, 7
  %v1493 = vrot.slane %v1492, 2
  %v1494 = vrot.slane %v297, 7
  %v1495 = vsel %vm1403, %v1493, %v1494
  %v1496 = vrot.slane %v304, 7
  %v1497 = vrot.slane %v1496, 2
  %v1498 = vrot.slane %v305, 7
  %v1499 = vsel %vm1403, %v1497, %v1498
  %v1500 = vrot.slane %v312, 7
  %v1501 = vrot.slane %v1500, 2
  %v1502 = vrot.slane %v313, 7
  %v1503 = vsel %vm1403, %v1501, %v1502
  %v1504 = vrot.slane %v320, 7
  %v1505 = vrot.slane %v1504, 2
  %v1506 = vrot.slane %v321, 7
  %v1507 = vsel %vm1403, %v1505, %v1506
  %v1508 = vrot.slane %v328, 7
  %v1509 = vrot.slane %v1508, 2
  %v1510 = vrot.slane %v329, 7
  %v1511 = vsel %vm1403, %v1509, %v1510
  %v1512 = vrot.slane %v336, 7
  %v1513 = vrot.slane %v1512, 2
  %v1514 = vrot.slane %v337, 7
  %v1515 = vsel %vm1403, %v1513, %v1514
  %v1516 = vrot.slane %v344, 7
  %v1517 = vrot.slane %v1516, 2
  %v1518 = vrot.slane %v345, 7
  %v1519 = vsel %vm1403, %v1517, %v1518
  %v1520 = vrot.slane %v352, 7
  %v1521 = vrot.slane %v1520, 2
  %v1522 = vrot.slane %v353, 7
  %v1523 = vsel %vm1403, %v1521, %v1522
  %v1524 = vrot.slane %v360, 7
  %v1525 = vrot.slane %v1524, 2
  %v1526 = vrot.slane %v361, 7
  %v1527 = vsel %vm1403, %v1525, %v1526
  %v1528 = vrot.slane %v368, 7
  %v1529 = vrot.slane %v1528, 2
  %v1530 = vrot.slane %v369, 7
  %v1531 = vsel %vm1403, %v1529, %v1530
  %v1532 = vcombine.low %v1407, %v1411
  %v1533 = vcombine.low %v1415, %v1419
  %v1535 = vunpack.c.l.s4 1983009808
  %v1536 = vunpack.c.0.s8 %v1535
  %v1537 = vlaneseq
  %v1538 = vshrl.u32 %v1537, 7
  %v1539 = vsub.s32 %v1536, %v1538
  %v1540 = vrot.slane %v1532, %v1539
  %v1542 = vunpack.c.l.s4 1983009808
  %v1543 = vunpack.c.0.s8 %v1542
  %v1544 = vlaneseq
  %v1545 = vshrl.u32 %v1544, 7
  %v1546 = vsub.s32 %v1543, %v1545
  %v1547 = vrot.slane %v1533, %v1546
  %v1548 = vcombine.low %v1540, %v1547
  %v1549 = vcombine.low %v1423, %v1427
  %v1550 = vcombine.low %v1431, %v1435
  %v1552 = vunpack.c.l.s4 1983009808
  %v1553 = vunpack.c.0.s8 %v1552
  %v1554 = vlaneseq
  %v1555 = vshrl.u32 %v1554, 7
  %v1556 = vsub.s32 %v1553, %v1555
  %v1557 = vrot.slane %v1549, %v1556
  %v1559 = vunpack.c.l.s4 1983009808
  %v1560 = vunpack.c.0.s8 %v1559
  %v1561 = vlaneseq
  %v1562 = vshrl.u32 %v1561, 7
  %v1563 = vsub.s32 %v1560, %v1562
  %v1564 = vrot.slane %v1550, %v1563
  %v1565 = vcombine.low %v1557, %v1564
  %v1566 = vcombine.low %v1439, %v1443
  %v1567 = vcombine.low %v1447, %v1451
  %v1569 = vunpack.c.l.s4 1983009808
  %v1570 = vunpack.c.0.s8 %v1569
  %v1571 = vlaneseq
  %v1572 = vshrl.u32 %v1571, 7
  %v1573 = vsub.s32 %v1570, %v1572
  %v1574 = vrot.slane %v1566, %v1573
  %v1576 = vunpack.c.l.s4 1983009808
  %v1577 = vunpack.c.0.s8 %v1576
  %v1578 = vlaneseq
  %v1579 = vshrl.u32 %v1578, 7
  %v1580 = vsub.s32 %v1577, %v1579
  %v1581 = vrot.slane %v1567, %v1580
  %v1582 = vcombine.low %v1574, %v1581
  %v1583 = vcombine.low %v1455, %v1459
  %v1584 = vcombine.low %v1463, %v1467
  %v1586 = vunpack.c.l.s4 1983009808
  %v1587 = vunpack.c.0.s8 %v1586
  %v1588 = vlaneseq
  %v1589 = vshrl.u32 %v1588, 7
  %v1590 = vsub.s32 %v1587, %v1589
  %v1591 = vrot.slane %v1583, %v1590
  %v1593 = vunpack.c.l.s4 1983009808
  %v1594 = vunpack.c.0.s8 %v1593
  %v1595 = vlaneseq
  %v1596 = vshrl.u32 %v1595, 7
  %v1597 = vsub.s32 %v1594, %v1596
  %v1598 = vrot.slane %v1584, %v1597
  %v1599 = vcombine.low %v1591, %v1598
  %v1600 = vcombine.low %v1471, %v1475
  %v1601 = vcombine.low %v1479, %v1483
  %v1603 = vunpack.c.l.s4 1983009808
  %v1604 = vunpack.c.0.s8 %v1603
  %v1605 = vlaneseq
  %v1606 = vshrl.u32 %v1605, 7
  %v1607 = vsub.s32 %v1604, %v1606
  %v1608 = vrot.slane %v1600, %v1607
  %v1610 = vunpack.c.l.s4 1983009808
  %v1611 = vunpack.c.0.s8 %v1610
  %v1612 = vlaneseq
  %v1613 = vshrl.u32 %v1612, 7
  %v1614 = vsub.s32 %v1611, %v1613
  %v1615 = vrot.slane %v1601, %v1614
  %v1616 = vcombine.low %v1608, %v1615
  %v1617 = vcombine.low %v1487, %v1491
  %v1618 = vcombine.low %v1495, %v1499
  %v1620 = vunpack.c.l.s4 1983009808
  %v1621 = vunpack.c.0.s8 %v1620
  %v1622 = vlaneseq
  %v1623 = vshrl.u32 %v1622, 7
  %v1624 = vsub.s32 %v1621, %v1623
  %v1625 = vrot.slane %v1617, %v1624
  %v1627 = vunpack.c.l.s4 1983009808
  %v1628 = vunpack.c.0.s8 %v1627
  %v1629 = vlaneseq
  %v1630 = vshrl.u32 %v1629, 7
  %v1631 = vsub.s32 %v1628, %v1630
  %v1632 = vrot.slane %v1618, %v1631
  %v1633 = vcombine.low %v1625, %v1632
  %v1634 = vcombine.low %v1503, %v1507
  %v1635 = vcombine.low %v1511, %v1515
  %v1637 = vunpack.c.l.s4 1983009808
  %v1638 = vunpack.c.0.s8 %v1637
  %v1639 = vlaneseq
  %v1640 = vshrl.u32 %v1639, 7
  %v1641 = vsub.s32 %v1638, %v1640
  %v1642 = vrot.slane %v1634, %v1641
  %v1644 = vunpack.c.l.s4 1983009808
  %v1645 = vunpack.c.0.s8 %v1644
  %v1646 = vlaneseq
  %v1647 = vshrl.u32 %v1646, 7
  %v1648 = vsub.s32 %v1645, %v1647
  %v1649 = vrot.slane %v1635, %v1648
  %v1650 = vcombine.low %v1642, %v1649
  %v1651 = vcombine.low %v1519, %v1523
  %v1652 = vcombine.low %v1527, %v1531
  %v1654 = vunpack.c.l.s4 1983009808
  %v1655 = vunpack.c.0.s8 %v1654
  %v1656 = vlaneseq
  %v1657 = vshrl.u32 %v1656, 7
  %v1658 = vsub.s32 %v1655, %v1657
  %v1659 = vrot.slane %v1651, %v1658
  %v1661 = vunpack.c.l.s4 1983009808
  %v1662 = vunpack.c.0.s8 %v1661
  %v1663 = vlaneseq
  %v1664 = vshrl.u32 %v1663, 7
  %v1665 = vsub.s32 %v1662, %v1664
  %v1666 = vrot.slane %v1652, %v1665
  %v1667 = vcombine.low %v1659, %v1666
  %v1669 = vsel %vm961, %v1548, 0
  %v1672 = vsel %vm961, %v1565, 0
  %v1675 = vsel %vm961, %v1582, 0
  %v1678 = vsel %vm961, %v1599, 0
  %v1681 = vsel %vm961, %v1616, 0
  %v1684 = vsel %vm961, %v1633, 0
  %v1687 = vsel %vm961, %v1650, 0
  %v1690 = vsel %vm961, %v1667, 0
  %v1693 = vsel %vm986, %v1396, 0
  %1695 = vmatprep.subr.bf16.mxu0 0
  %1696 = vmatpush1.bf16.msra.mxu0 0
  %1697 = vmatprep.subr.bf16.mxu0 0
  %1698 = vmatpush1.bf16.msra.mxu0 0
  %1699 = vmatprep.subr.bf16.mxu0 0
  %1700 = vmatpush1.bf16.msra.mxu0 0
  %1701 = vmatprep.subr.bf16.mxu0 0
  %1702 = vmatpush1.bf16.msra.mxu0 0
  %1703 = vmatprep.subr.bf16.mxu0 0
  %1704 = vmatpush1.bf16.msra.mxu0 0
  %1705 = vmatprep.subr.bf16.mxu0 0
  %1706 = vmatpush1.bf16.msra.mxu0 0
  %1707 = vmatprep.subr.bf16.mxu0 0
  %1708 = vmatpush1.bf16.msra.mxu0 0
  %1709 = vmatprep.subr.bf16.mxu0 0
  %1710 = vmatpush1.bf16.msra.mxu0 %v1693
  %1711 = vmatprep.subr.bf16.mxu0 0
  %1712 = vmatpush2.bf16.msra.mxu0 0
  %1713 = vmatprep.subr.bf16.mxu0 0
  %1714 = vmatpush2.bf16.msra.mxu0 0
  %1715 = vmatprep.subr.bf16.mxu0 0
  %1716 = vmatpush2.bf16.msra.mxu0 0
  %1717 = vmatprep.subr.bf16.mxu0 0
  %1718 = vmatpush2.bf16.msra.mxu0 0
  %1719 = vmatprep.subr.bf16.mxu0 0
  %1720 = vmatpush2.bf16.msra.mxu0 0
  %1721 = vmatprep.subr.bf16.mxu0 0
  %1722 = vmatpush2.bf16.msra.mxu0 0
  %1723 = vmatprep.subr.bf16.mxu0 0
  %1724 = vmatpush2.bf16.msra.mxu0 0
  %1725 = vmatprep.subr.bf16.mxu0 0
  %1726 = vmatpush2.bf16.msra.mxu0 0
  %1727 = vmatprep.mubr.bf16.mxu0 0
  %1728 = vmatmul.mubr.bf16.gmra.mxu0 %v1669
  %v1729 = vpop.f32.mrf.mxu0
  %v1730 = vadd.f32 0.0, %v1729
  %v1731 = vpop.f32.mrf.mxu0
  %v1732 = vpop.f32.mrf.mxu0
  %v1733 = vadd.f32 0.0, %v1732
  %v1734 = vpop.f32.mrf.mxu0
  %1735 = vmatprep.mubr.bf16.mxu0 0
  %1736 = vmatmul.mubr.bf16.gmra.mxu0 %v1672
  %v1737 = vpop.f32.mrf.mxu0
  %v1738 = vadd.f32 0.0, %v1737
  %v1739 = vpop.f32.mrf.mxu0
  %v1740 = vpop.f32.mrf.mxu0
  %v1741 = vadd.f32 0.0, %v1740
  %v1742 = vpop.f32.mrf.mxu0
  %1743 = vmatprep.mubr.bf16.mxu0 0
  %1744 = vmatmul.mubr.bf16.gmra.mxu0 %v1675
  %v1745 = vpop.f32.mrf.mxu0
  %v1746 = vadd.f32 0.0, %v1745
  %v1747 = vpop.f32.mrf.mxu0
  %v1748 = vpop.f32.mrf.mxu0
  %v1749 = vadd.f32 0.0, %v1748
  %v1750 = vpop.f32.mrf.mxu0
  %1751 = vmatprep.mubr.bf16.mxu0 0
  %1752 = vmatmul.mubr.bf16.gmra.mxu0 %v1678
  %v1753 = vpop.f32.mrf.mxu0
  %v1754 = vadd.f32 0.0, %v1753
  %v1755 = vpop.f32.mrf.mxu0
  %v1756 = vpop.f32.mrf.mxu0
  %v1757 = vadd.f32 0.0, %v1756
  %v1758 = vpop.f32.mrf.mxu0
  %1759 = vmatprep.mubr.bf16.mxu0 0
  %1760 = vmatmul.mubr.bf16.gmra.mxu0 %v1681
  %v1761 = vpop.f32.mrf.mxu0
  %v1762 = vadd.f32 0.0, %v1761
  %v1763 = vpop.f32.mrf.mxu0
  %v1764 = vpop.f32.mrf.mxu0
  %v1765 = vadd.f32 0.0, %v1764
  %v1766 = vpop.f32.mrf.mxu0
  %1767 = vmatprep.mubr.bf16.mxu0 0
  %1768 = vmatmul.mubr.bf16.gmra.mxu0 %v1684
  %v1769 = vpop.f32.mrf.mxu0
  %v1770 = vadd.f32 0.0, %v1769
  %v1771 = vpop.f32.mrf.mxu0
  %v1772 = vpop.f32.mrf.mxu0
  %v1773 = vadd.f32 0.0, %v1772
  %v1774 = vpop.f32.mrf.mxu0
  %1775 = vmatprep.mubr.bf16.mxu0 0
  %1776 = vmatmul.mubr.bf16.gmra.mxu0 %v1687
  %v1777 = vpop.f32.mrf.mxu0
  %v1778 = vadd.f32 0.0, %v1777
  %v1779 = vpop.f32.mrf.mxu0
  %v1780 = vpop.f32.mrf.mxu0
  %v1781 = vadd.f32 0.0, %v1780
  %v1782 = vpop.f32.mrf.mxu0
  %1783 = vmatprep.mubr.bf16.mxu0 0
  %1784 = vmatmul.mubr.bf16.gmra.mxu0 %v1690
  %v1785 = vpop.f32.mrf.mxu0
  %v1786 = vadd.f32 0.0, %v1785
  %v1787 = vpop.f32.mrf.mxu0
  %v1788 = vpop.f32.mrf.mxu0
  %v1789 = vadd.f32 0.0, %v1788
  %v1790 = vpop.f32.mrf.mxu0
  %1791 = vdwg.mxu0
  %v1808 = vcombine.high %v1730, %v1730
  %v1809 = vcombine.high %v1733, %v1733
  %v1810 = vcombine.high %v1738, %v1738
  %v1811 = vcombine.high %v1741, %v1741
  %v1812 = vcombine.high %v1746, %v1746
  %v1813 = vcombine.high %v1749, %v1749
  %v1814 = vcombine.high %v1754, %v1754
  %v1815 = vcombine.high %v1757, %v1757
  %v1816 = vcombine.high %v1762, %v1762
  %v1817 = vcombine.high %v1765, %v1765
  %v1818 = vcombine.high %v1770, %v1770
  %v1819 = vcombine.high %v1773, %v1773
  %v1820 = vcombine.high %v1778, %v1778
  %v1821 = vcombine.high %v1781, %v1781
  %v1822 = vcombine.high %v1786, %v1786
  %v1823 = vcombine.high %v1789, %v1789
  %v1840 = vadd.f32 %v1285, %v1730
  %v1841 = vadd.f32 %v1363, %v1808
  %v1842 = vadd.f32 %v1288, %v1733
  %v1843 = vadd.f32 %v1364, %v1809
  %v1844 = vadd.f32 %v1293, %v1738
  %v1845 = vadd.f32 %v1365, %v1810
  %v1846 = vadd.f32 %v1296, %v1741
  %v1847 = vadd.f32 %v1366, %v1811
  %v1848 = vadd.f32 %v1301, %v1746
  %v1849 = vadd.f32 %v1367, %v1812
  %v1850 = vadd.f32 %v1304, %v1749
  %v1851 = vadd.f32 %v1368, %v1813
  %v1852 = vadd.f32 %v1309, %v1754
  %v1853 = vadd.f32 %v1369, %v1814
  %v1854 = vadd.f32 %v1312, %v1757
  %v1855 = vadd.f32 %v1370, %v1815
  %v1856 = vadd.f32 %v1317, %v1762
  %v1857 = vadd.f32 %v1371, %v1816
  %v1858 = vadd.f32 %v1320, %v1765
  %v1859 = vadd.f32 %v1372, %v1817
  %v1860 = vadd.f32 %v1325, %v1770
  %v1861 = vadd.f32 %v1373, %v1818
  %v1862 = vadd.f32 %v1328, %v1773
  %v1863 = vadd.f32 %v1374, %v1819
  %v1864 = vadd.f32 %v1333, %v1778
  %v1865 = vadd.f32 %v1375, %v1820
  %v1866 = vadd.f32 %v1336, %v1781
  %v1867 = vadd.f32 %v1376, %v1821
  %v1868 = vadd.f32 %v1341, %v1786
  %v1869 = vadd.f32 %v1377, %v1822
  %v1870 = vadd.f32 %v1344, %v1789
  %v1871 = vadd.f32 %v1378, %v1823
  %s1872 = scalar_lea.vmem %s1, 12
  %v1873 = vld [vmem:[%s1872] sm:$0xf]
  %vm1874 = vsmask.f32 256
  %vm1875 = vsmask.f32 2312
  %vm1876 = vmor %vm1874, %vm1875
  %vm1877 = vsmask.f32 4368
  %vm1878 = vmor %vm1876, %vm1877
  %vm1879 = vsmask.f32 6424
  %vm1880 = vmor %vm1878, %vm1879
  %v1881 = vrot.slane %v378, 7
  %v1882 = vrot.slane %v1881, 2
  %v1883 = vshrl.u32 %v121, 16
  %v1885 = vrot.slane %v1883, 7
  %v1886 = vor.u32 %v1885, %v387
  %v1887 = vsel %vm1880, %v1882, %v1886
  %v1888 = vrot.slane %v392, 7
  %v1889 = vrot.slane %v1888, 2
  %v1890 = vshrl.u32 %v129, 16
  %v1892 = vrot.slane %v1890, 7
  %v1893 = vor.u32 %v1892, %v401
  %v1894 = vsel %vm1880, %v1889, %v1893
  %v1895 = vrot.slane %v406, 7
  %v1896 = vrot.slane %v1895, 2
  %v1897 = vshrl.u32 %v137, 16
  %v1899 = vrot.slane %v1897, 7
  %v1900 = vor.u32 %v1899, %v415
  %v1901 = vsel %vm1880, %v1896, %v1900
  %v1902 = vrot.slane %v420, 7
  %v1903 = vrot.slane %v1902, 2
  %v1904 = vshrl.u32 %v145, 16
  %v1906 = vrot.slane %v1904, 7
  %v1907 = vor.u32 %v1906, %v429
  %v1908 = vsel %vm1880, %v1903, %v1907
  %v1909 = vrot.slane %v434, 7
  %v1910 = vrot.slane %v1909, 2
  %v1911 = vshrl.u32 %v153, 16
  %v1913 = vrot.slane %v1911, 7
  %v1914 = vor.u32 %v1913, %v443
  %v1915 = vsel %vm1880, %v1910, %v1914
  %v1916 = vrot.slane %v448, 7
  %v1917 = vrot.slane %v1916, 2
  %v1918 = vshrl.u32 %v161, 16
  %v1920 = vrot.slane %v1918, 7
  %v1921 = vor.u32 %v1920, %v457
  %v1922 = vsel %vm1880, %v1917, %v1921
  %v1923 = vrot.slane %v462, 7
  %v1924 = vrot.slane %v1923, 2
  %v1925 = vshrl.u32 %v169, 16
  %v1927 = vrot.slane %v1925, 7
  %v1928 = vor.u32 %v1927, %v471
  %v1929 = vsel %vm1880, %v1924, %v1928
  %v1930 = vrot.slane %v476, 7
  %v1931 = vrot.slane %v1930, 2
  %v1932 = vshrl.u32 %v177, 16
  %v1934 = vrot.slane %v1932, 7
  %v1935 = vor.u32 %v1934, %v485
  %v1936 = vsel %vm1880, %v1931, %v1935
  %v1937 = vrot.slane %v490, 7
  %v1938 = vrot.slane %v1937, 2
  %v1939 = vshrl.u32 %v185, 16
  %v1941 = vrot.slane %v1939, 7
  %v1942 = vor.u32 %v1941, %v499
  %v1943 = vsel %vm1880, %v1938, %v1942
  %v1944 = vrot.slane %v504, 7
  %v1945 = vrot.slane %v1944, 2
  %v1946 = vshrl.u32 %v193, 16
  %v1948 = vrot.slane %v1946, 7
  %v1949 = vor.u32 %v1948, %v513
  %v1950 = vsel %vm1880, %v1945, %v1949
  %v1951 = vrot.slane %v518, 7
  %v1952 = vrot.slane %v1951, 2
  %v1953 = vshrl.u32 %v201, 16
  %v1955 = vrot.slane %v1953, 7
  %v1956 = vor.u32 %v1955, %v527
  %v1957 = vsel %vm1880, %v1952, %v1956
  %v1958 = vrot.slane %v532, 7
  %v1959 = vrot.slane %v1958, 2
  %v1960 = vshrl.u32 %v209, 16
  %v1962 = vrot.slane %v1960, 7
  %v1963 = vor.u32 %v1962, %v541
  %v1964 = vsel %vm1880, %v1959, %v1963
  %v1965 = vrot.slane %v546, 7
  %v1966 = vrot.slane %v1965, 2
  %v1967 = vshrl.u32 %v217, 16
  %v1969 = vrot.slane %v1967, 7
  %v1970 = vor.u32 %v1969, %v555
  %v1971 = vsel %vm1880, %v1966, %v1970
  %v1972 = vrot.slane %v560, 7
  %v1973 = vrot.slane %v1972, 2
  %v1974 = vshrl.u32 %v225, 16
  %v1976 = vrot.slane %v1974, 7
  %v1977 = vor.u32 %v1976, %v569
  %v1978 = vsel %vm1880, %v1973, %v1977
  %v1979 = vrot.slane %v574, 7
  %v1980 = vrot.slane %v1979, 2
  %v1981 = vshrl.u32 %v233, 16
  %v1983 = vrot.slane %v1981, 7
  %v1984 = vor.u32 %v1983, %v583
  %v1985 = vsel %vm1880, %v1980, %v1984
  %v1986 = vrot.slane %v588, 7
  %v1987 = vrot.slane %v1986, 2
  %v1988 = vshrl.u32 %v241, 16
  %v1990 = vrot.slane %v1988, 7
  %v1991 = vor.u32 %v1990, %v597
  %v1992 = vsel %vm1880, %v1987, %v1991
  %v1993 = vrot.slane %v602, 7
  %v1994 = vrot.slane %v1993, 2
  %v1995 = vshrl.u32 %v249, 16
  %v1997 = vrot.slane %v1995, 7
  %v1998 = vor.u32 %v1997, %v611
  %v1999 = vsel %vm1880, %v1994, %v1998
  %v2000 = vrot.slane %v616, 7
  %v2001 = vrot.slane %v2000, 2
  %v2002 = vshrl.u32 %v257, 16
  %v2004 = vrot.slane %v2002, 7
  %v2005 = vor.u32 %v2004, %v625
  %v2006 = vsel %vm1880, %v2001, %v2005
  %v2007 = vrot.slane %v630, 7
  %v2008 = vrot.slane %v2007, 2
  %v2009 = vshrl.u32 %v265, 16
  %v2011 = vrot.slane %v2009, 7
  %v2012 = vor.u32 %v2011, %v639
  %v2013 = vsel %vm1880, %v2008, %v2012
  %v2014 = vrot.slane %v644, 7
  %v2015 = vrot.slane %v2014, 2
  %v2016 = vshrl.u32 %v273, 16
  %v2018 = vrot.slane %v2016, 7
  %v2019 = vor.u32 %v2018, %v653
  %v2020 = vsel %vm1880, %v2015, %v2019
  %v2021 = vrot.slane %v658, 7
  %v2022 = vrot.slane %v2021, 2
  %v2023 = vshrl.u32 %v281, 16
  %v2025 = vrot.slane %v2023, 7
  %v2026 = vor.u32 %v2025, %v667
  %v2027 = vsel %vm1880, %v2022, %v2026
  %v2028 = vrot.slane %v672, 7
  %v2029 = vrot.slane %v2028, 2
  %v2030 = vshrl.u32 %v289, 16
  %v2032 = vrot.slane %v2030, 7
  %v2033 = vor.u32 %v2032, %v681
  %v2034 = vsel %vm1880, %v2029, %v2033
  %v2035 = vrot.slane %v686, 7
  %v2036 = vrot.slane %v2035, 2
  %v2037 = vshrl.u32 %v297, 16
  %v2039 = vrot.slane %v2037, 7
  %v2040 = vor.u32 %v2039, %v695
  %v2041 = vsel %vm1880, %v2036, %v2040
  %v2042 = vrot.slane %v700, 7
  %v2043 = vrot.slane %v2042, 2
  %v2044 = vshrl.u32 %v305, 16
  %v2046 = vrot.slane %v2044, 7
  %v2047 = vor.u32 %v2046, %v709
  %v2048 = vsel %vm1880, %v2043, %v2047
  %v2049 = vrot.slane %v714, 7
  %v2050 = vrot.slane %v2049, 2
  %v2051 = vshrl.u32 %v313, 16
  %v2053 = vrot.slane %v2051, 7
  %v2054 = vor.u32 %v2053, %v723
  %v2055 = vsel %vm1880, %v2050, %v2054
  %v2056 = vrot.slane %v728, 7
  %v2057 = vrot.slane %v2056, 2
  %v2058 = vshrl.u32 %v321, 16
  %v2060 = vrot.slane %v2058, 7
  %v2061 = vor.u32 %v2060, %v737
  %v2062 = vsel %vm1880, %v2057, %v2061
  %v2063 = vrot.slane %v742, 7
  %v2064 = vrot.slane %v2063, 2
  %v2065 = vshrl.u32 %v329, 16
  %v2067 = vrot.slane %v2065, 7
  %v2068 = vor.u32 %v2067, %v751
  %v2069 = vsel %vm1880, %v2064, %v2068
  %v2070 = vrot.slane %v756, 7
  %v2071 = vrot.slane %v2070, 2
  %v2072 = vshrl.u32 %v337, 16
  %v2074 = vrot.slane %v2072, 7
  %v2075 = vor.u32 %v2074, %v765
  %v2076 = vsel %vm1880, %v2071, %v2075
  %v2077 = vrot.slane %v770, 7
  %v2078 = vrot.slane %v2077, 2
  %v2079 = vshrl.u32 %v345, 16
  %v2081 = vrot.slane %v2079, 7
  %v2082 = vor.u32 %v2081, %v779
  %v2083 = vsel %vm1880, %v2078, %v2082
  %v2084 = vrot.slane %v784, 7
  %v2085 = vrot.slane %v2084, 2
  %v2086 = vshrl.u32 %v353, 16
  %v2088 = vrot.slane %v2086, 7
  %v2089 = vor.u32 %v2088, %v793
  %v2090 = vsel %vm1880, %v2085, %v2089
  %v2091 = vrot.slane %v798, 7
  %v2092 = vrot.slane %v2091, 2
  %v2093 = vshrl.u32 %v361, 16
  %v2095 = vrot.slane %v2093, 7
  %v2096 = vor.u32 %v2095, %v807
  %v2097 = vsel %vm1880, %v2092, %v2096
  %v2098 = vrot.slane %v812, 7
  %v2099 = vrot.slane %v2098, 2
  %v2100 = vshrl.u32 %v369, 16
  %v2102 = vrot.slane %v2100, 7
  %v2103 = vor.u32 %v2102, %v821
  %v2104 = vsel %vm1880, %v2099, %v2103
  %v2105 = vcombine.low %v1887, %v1894
  %v2106 = vcombine.low %v1901, %v1908
  %v2108 = vunpack.c.l.s4 1983009808
  %v2109 = vunpack.c.0.s8 %v2108
  %v2110 = vlaneseq
  %v2111 = vshrl.u32 %v2110, 7
  %v2112 = vsub.s32 %v2109, %v2111
  %v2113 = vrot.slane %v2105, %v2112
  %v2115 = vunpack.c.l.s4 1983009808
  %v2116 = vunpack.c.0.s8 %v2115
  %v2117 = vlaneseq
  %v2118 = vshrl.u32 %v2117, 7
  %v2119 = vsub.s32 %v2116, %v2118
  %v2120 = vrot.slane %v2106, %v2119
  %v2121 = vcombine.low %v2113, %v2120
  %v2122 = vcombine.low %v1915, %v1922
  %v2123 = vcombine.low %v1929, %v1936
  %v2125 = vunpack.c.l.s4 1983009808
  %v2126 = vunpack.c.0.s8 %v2125
  %v2127 = vlaneseq
  %v2128 = vshrl.u32 %v2127, 7
  %v2129 = vsub.s32 %v2126, %v2128
  %v2130 = vrot.slane %v2122, %v2129
  %v2132 = vunpack.c.l.s4 1983009808
  %v2133 = vunpack.c.0.s8 %v2132
  %v2134 = vlaneseq
  %v2135 = vshrl.u32 %v2134, 7
  %v2136 = vsub.s32 %v2133, %v2135
  %v2137 = vrot.slane %v2123, %v2136
  %v2138 = vcombine.low %v2130, %v2137
  %v2139 = vcombine.low %v1943, %v1950
  %v2140 = vcombine.low %v1957, %v1964
  %v2142 = vunpack.c.l.s4 1983009808
  %v2143 = vunpack.c.0.s8 %v2142
  %v2144 = vlaneseq
  %v2145 = vshrl.u32 %v2144, 7
  %v2146 = vsub.s32 %v2143, %v2145
  %v2147 = vrot.slane %v2139, %v2146
  %v2149 = vunpack.c.l.s4 1983009808
  %v2150 = vunpack.c.0.s8 %v2149
  %v2151 = vlaneseq
  %v2152 = vshrl.u32 %v2151, 7
  %v2153 = vsub.s32 %v2150, %v2152
  %v2154 = vrot.slane %v2140, %v2153
  %v2155 = vcombine.low %v2147, %v2154
  %v2156 = vcombine.low %v1971, %v1978
  %v2157 = vcombine.low %v1985, %v1992
  %v2159 = vunpack.c.l.s4 1983009808
  %v2160 = vunpack.c.0.s8 %v2159
  %v2161 = vlaneseq
  %v2162 = vshrl.u32 %v2161, 7
  %v2163 = vsub.s32 %v2160, %v2162
  %v2164 = vrot.slane %v2156, %v2163
  %v2166 = vunpack.c.l.s4 1983009808
  %v2167 = vunpack.c.0.s8 %v2166
  %v2168 = vlaneseq
  %v2169 = vshrl.u32 %v2168, 7
  %v2170 = vsub.s32 %v2167, %v2169
  %v2171 = vrot.slane %v2157, %v2170
  %v2172 = vcombine.low %v2164, %v2171
  %v2173 = vcombine.low %v1999, %v2006
  %v2174 = vcombine.low %v2013, %v2020
  %v2176 = vunpack.c.l.s4 1983009808
  %v2177 = vunpack.c.0.s8 %v2176
  %v2178 = vlaneseq
  %v2179 = vshrl.u32 %v2178, 7
  %v2180 = vsub.s32 %v2177, %v2179
  %v2181 = vrot.slane %v2173, %v2180
  %v2183 = vunpack.c.l.s4 1983009808
  %v2184 = vunpack.c.0.s8 %v2183
  %v2185 = vlaneseq
  %v2186 = vshrl.u32 %v2185, 7
  %v2187 = vsub.s32 %v2184, %v2186
  %v2188 = vrot.slane %v2174, %v2187
  %v2189 = vcombine.low %v2181, %v2188
  %v2190 = vcombine.low %v2027, %v2034
  %v2191 = vcombine.low %v2041, %v2048
  %v2193 = vunpack.c.l.s4 1983009808
  %v2194 = vunpack.c.0.s8 %v2193
  %v2195 = vlaneseq
  %v2196 = vshrl.u32 %v2195, 7
  %v2197 = vsub.s32 %v2194, %v2196
  %v2198 = vrot.slane %v2190, %v2197
  %v2200 = vunpack.c.l.s4 1983009808
  %v2201 = vunpack.c.0.s8 %v2200
  %v2202 = vlaneseq
  %v2203 = vshrl.u32 %v2202, 7
  %v2204 = vsub.s32 %v2201, %v2203
  %v2205 = vrot.slane %v2191, %v2204
  %v2206 = vcombine.low %v2198, %v2205
  %v2207 = vcombine.low %v2055, %v2062
  %v2208 = vcombine.low %v2069, %v2076
  %v2210 = vunpack.c.l.s4 1983009808
  %v2211 = vunpack.c.0.s8 %v2210
  %v2212 = vlaneseq
  %v2213 = vshrl.u32 %v2212, 7
  %v2214 = vsub.s32 %v2211, %v2213
  %v2215 = vrot.slane %v2207, %v2214
  %v2217 = vunpack.c.l.s4 1983009808
  %v2218 = vunpack.c.0.s8 %v2217
  %v2219 = vlaneseq
  %v2220 = vshrl.u32 %v2219, 7
  %v2221 = vsub.s32 %v2218, %v2220
  %v2222 = vrot.slane %v2208, %v2221
  %v2223 = vcombine.low %v2215, %v2222
  %v2224 = vcombine.low %v2083, %v2090
  %v2225 = vcombine.low %v2097, %v2104
  %v2227 = vunpack.c.l.s4 1983009808
  %v2228 = vunpack.c.0.s8 %v2227
  %v2229 = vlaneseq
  %v2230 = vshrl.u32 %v2229, 7
  %v2231 = vsub.s32 %v2228, %v2230
  %v2232 = vrot.slane %v2224, %v2231
  %v2234 = vunpack.c.l.s4 1983009808
  %v2235 = vunpack.c.0.s8 %v2234
  %v2236 = vlaneseq
  %v2237 = vshrl.u32 %v2236, 7
  %v2238 = vsub.s32 %v2235, %v2237
  %v2239 = vrot.slane %v2225, %v2238
  %v2240 = vcombine.low %v2232, %v2239
  %v2242 = vsel %vm961, %v2121, 0
  %v2245 = vsel %vm961, %v2138, 0
  %v2248 = vsel %vm961, %v2155, 0
  %v2251 = vsel %vm961, %v2172, 0
  %v2254 = vsel %vm961, %v2189, 0
  %v2257 = vsel %vm961, %v2206, 0
  %v2260 = vsel %vm961, %v2223, 0
  %v2263 = vsel %vm961, %v2240, 0
  %v2266 = vsel %vm986, %v1873, 0
  %2268 = vmatprep.subr.bf16.mxu0 0
  %2269 = vmatpush1.bf16.msra.mxu0 0
  %2270 = vmatprep.subr.bf16.mxu0 0
  %2271 = vmatpush1.bf16.msra.mxu0 0
  %2272 = vmatprep.subr.bf16.mxu0 0
  %2273 = vmatpush1.bf16.msra.mxu0 0
  %2274 = vmatprep.subr.bf16.mxu0 0
  %2275 = vmatpush1.bf16.msra.mxu0 0
  %2276 = vmatprep.subr.bf16.mxu0 0
  %2277 = vmatpush1.bf16.msra.mxu0 0
  %2278 = vmatprep.subr.bf16.mxu0 0
  %2279 = vmatpush1.bf16.msra.mxu0 0
  %2280 = vmatprep.subr.bf16.mxu0 0
  %2281 = vmatpush1.bf16.msra.mxu0 0
  %2282 = vmatprep.subr.bf16.mxu0 0
  %2283 = vmatpush1.bf16.msra.mxu0 %v2266
  %2284 = vmatprep.subr.bf16.mxu0 0
  %2285 = vmatpush2.bf16.msra.mxu0 0
  %2286 = vmatprep.subr.bf16.mxu0 0
  %2287 = vmatpush2.bf16.msra.mxu0 0
  %2288 = vmatprep.subr.bf16.mxu0 0
  %2289 = vmatpush2.bf16.msra.mxu0 0
  %2290 = vmatprep.subr.bf16.mxu0 0
  %2291 = vmatpush2.bf16.msra.mxu0 0
  %2292 = vmatprep.subr.bf16.mxu0 0
  %2293 = vmatpush2.bf16.msra.mxu0 0
  %2294 = vmatprep.subr.bf16.mxu0 0
  %2295 = vmatpush2.bf16.msra.mxu0 0
  %2296 = vmatprep.subr.bf16.mxu0 0
  %2297 = vmatpush2.bf16.msra.mxu0 0
  %2298 = vmatprep.subr.bf16.mxu0 0
  %2299 = vmatpush2.bf16.msra.mxu0 0
  %2300 = vmatprep.mubr.bf16.mxu0 0
  %2301 = vmatmul.mubr.bf16.gmra.mxu0 %v2242
  %v2302 = vpop.f32.mrf.mxu0
  %v2303 = vadd.f32 0.0, %v2302
  %v2304 = vpop.f32.mrf.mxu0
  %v2305 = vpop.f32.mrf.mxu0
  %v2306 = vadd.f32 0.0, %v2305
  %v2307 = vpop.f32.mrf.mxu0
  %2308 = vmatprep.mubr.bf16.mxu0 0
  %2309 = vmatmul.mubr.bf16.gmra.mxu0 %v2245
  %v2310 = vpop.f32.mrf.mxu0
  %v2311 = vadd.f32 0.0, %v2310
  %v2312 = vpop.f32.mrf.mxu0
  %v2313 = vpop.f32.mrf.mxu0
  %v2314 = vadd.f32 0.0, %v2313
  %v2315 = vpop.f32.mrf.mxu0
  %2316 = vmatprep.mubr.bf16.mxu0 0
  %2317 = vmatmul.mubr.bf16.gmra.mxu0 %v2248
  %v2318 = vpop.f32.mrf.mxu0
  %v2319 = vadd.f32 0.0, %v2318
  %v2320 = vpop.f32.mrf.mxu0
  %v2321 = vpop.f32.mrf.mxu0
  %v2322 = vadd.f32 0.0, %v2321
  %v2323 = vpop.f32.mrf.mxu0
  %2324 = vmatprep.mubr.bf16.mxu0 0
  %2325 = vmatmul.mubr.bf16.gmra.mxu0 %v2251
  %v2326 = vpop.f32.mrf.mxu0
  %v2327 = vadd.f32 0.0, %v2326
  %v2328 = vpop.f32.mrf.mxu0
  %v2329 = vpop.f32.mrf.mxu0
  %v2330 = vadd.f32 0.0, %v2329
  %v2331 = vpop.f32.mrf.mxu0
  %2332 = vmatprep.mubr.bf16.mxu0 0
  %2333 = vmatmul.mubr.bf16.gmra.mxu0 %v2254
  %v2334 = vpop.f32.mrf.mxu0
  %v2335 = vadd.f32 0.0, %v2334
  %v2336 = vpop.f32.mrf.mxu0
  %v2337 = vpop.f32.mrf.mxu0
  %v2338 = vadd.f32 0.0, %v2337
  %v2339 = vpop.f32.mrf.mxu0
  %2340 = vmatprep.mubr.bf16.mxu0 0
  %2341 = vmatmul.mubr.bf16.gmra.mxu0 %v2257
  %v2342 = vpop.f32.mrf.mxu0
  %v2343 = vadd.f32 0.0, %v2342
  %v2344 = vpop.f32.mrf.mxu0
  %v2345 = vpop.f32.mrf.mxu0
  %v2346 = vadd.f32 0.0, %v2345
  %v2347 = vpop.f32.mrf.mxu0
  %2348 = vmatprep.mubr.bf16.mxu0 0
  %2349 = vmatmul.mubr.bf16.gmra.mxu0 %v2260
  %v2350 = vpop.f32.mrf.mxu0
  %v2351 = vadd.f32 0.0, %v2350
  %v2352 = vpop.f32.mrf.mxu0
  %v2353 = vpop.f32.mrf.mxu0
  %v2354 = vadd.f32 0.0, %v2353
  %v2355 = vpop.f32.mrf.mxu0
  %2356 = vmatprep.mubr.bf16.mxu0 0
  %2357 = vmatmul.mubr.bf16.gmra.mxu0 %v2263
  %v2358 = vpop.f32.mrf.mxu0
  %v2359 = vadd.f32 0.0, %v2358
  %v2360 = vpop.f32.mrf.mxu0
  %v2361 = vpop.f32.mrf.mxu0
  %v2362 = vadd.f32 0.0, %v2361
  %v2363 = vpop.f32.mrf.mxu0
  %2364 = vdwg.mxu0
  %v2381 = vcombine.high %v2303, %v2303
  %v2382 = vcombine.high %v2306, %v2306
  %v2383 = vcombine.high %v2311, %v2311
  %v2384 = vcombine.high %v2314, %v2314
  %v2385 = vcombine.high %v2319, %v2319
  %v2386 = vcombine.high %v2322, %v2322
  %v2387 = vcombine.high %v2327, %v2327
  %v2388 = vcombine.high %v2330, %v2330
  %v2389 = vcombine.high %v2335, %v2335
  %v2390 = vcombine.high %v2338, %v2338
  %v2391 = vcombine.high %v2343, %v2343
  %v2392 = vcombine.high %v2346, %v2346
  %v2393 = vcombine.high %v2351, %v2351
  %v2394 = vcombine.high %v2354, %v2354
  %v2395 = vcombine.high %v2359, %v2359
  %v2396 = vcombine.high %v2362, %v2362
  %v2413 = vadd.f32 %v1840, %v2303
  %v2414 = vadd.f32 %v1841, %v2381
  %v2415 = vadd.f32 %v1842, %v2306
  %v2416 = vadd.f32 %v1843, %v2382
  %v2417 = vadd.f32 %v1844, %v2311
  %v2418 = vadd.f32 %v1845, %v2383
  %v2419 = vadd.f32 %v1846, %v2314
  %v2420 = vadd.f32 %v1847, %v2384
  %v2421 = vadd.f32 %v1848, %v2319
  %v2422 = vadd.f32 %v1849, %v2385
  %v2423 = vadd.f32 %v1850, %v2322
  %v2424 = vadd.f32 %v1851, %v2386
  %v2425 = vadd.f32 %v1852, %v2327
  %v2426 = vadd.f32 %v1853, %v2387
  %v2427 = vadd.f32 %v1854, %v2330
  %v2428 = vadd.f32 %v1855, %v2388
  %v2429 = vadd.f32 %v1856, %v2335
  %v2430 = vadd.f32 %v1857, %v2389
  %v2431 = vadd.f32 %v1858, %v2338
  %v2432 = vadd.f32 %v1859, %v2390
  %v2433 = vadd.f32 %v1860, %v2343
  %v2434 = vadd.f32 %v1861, %v2391
  %v2435 = vadd.f32 %v1862, %v2346
  %v2436 = vadd.f32 %v1863, %v2392
  %v2437 = vadd.f32 %v1864, %v2351
  %v2438 = vadd.f32 %v1865, %v2393
  %v2439 = vadd.f32 %v1866, %v2354
  %v2440 = vadd.f32 %v1867, %v2394
  %v2441 = vadd.f32 %v1868, %v2359
  %v2442 = vadd.f32 %v1869, %v2395
  %v2443 = vadd.f32 %v1870, %v2362
  %v2444 = vadd.f32 %v1871, %v2396
  %s2445 = scalar_lea.vmem %s1, 16
  %v2446 = vld [vmem:[%s2445] sm:$0xf]
  %v2447 = vcombine.low %v121, %v129
  %v2448 = vcombine.low %v137, %v145
  %v2450 = vunpack.c.l.s4 1983009808
  %v2451 = vunpack.c.0.s8 %v2450
  %v2452 = vlaneseq
  %v2453 = vshrl.u32 %v2452, 7
  %v2454 = vsub.s32 %v2451, %v2453
  %v2455 = vrot.slane %v2447, %v2454
  %v2457 = vunpack.c.l.s4 1983009808
  %v2458 = vunpack.c.0.s8 %v2457
  %v2459 = vlaneseq
  %v2460 = vshrl.u32 %v2459, 7
  %v2461 = vsub.s32 %v2458, %v2460
  %v2462 = vrot.slane %v2448, %v2461
  %v2463 = vcombine.low %v2455, %v2462
  %v2464 = vcombine.low %v153, %v161
  %v2465 = vcombine.low %v169, %v177
  %v2467 = vunpack.c.l.s4 1983009808
  %v2468 = vunpack.c.0.s8 %v2467
  %v2469 = vlaneseq
  %v2470 = vshrl.u32 %v2469, 7
  %v2471 = vsub.s32 %v2468, %v2470
  %v2472 = vrot.slane %v2464, %v2471
  %v2474 = vunpack.c.l.s4 1983009808
  %v2475 = vunpack.c.0.s8 %v2474
  %v2476 = vlaneseq
  %v2477 = vshrl.u32 %v2476, 7
  %v2478 = vsub.s32 %v2475, %v2477
  %v2479 = vrot.slane %v2465, %v2478
  %v2480 = vcombine.low %v2472, %v2479
  %v2481 = vcombine.low %v185, %v193
  %v2482 = vcombine.low %v201, %v209
  %v2484 = vunpack.c.l.s4 1983009808
  %v2485 = vunpack.c.0.s8 %v2484
  %v2486 = vlaneseq
  %v2487 = vshrl.u32 %v2486, 7
  %v2488 = vsub.s32 %v2485, %v2487
  %v2489 = vrot.slane %v2481, %v2488
  %v2491 = vunpack.c.l.s4 1983009808
  %v2492 = vunpack.c.0.s8 %v2491
  %v2493 = vlaneseq
  %v2494 = vshrl.u32 %v2493, 7
  %v2495 = vsub.s32 %v2492, %v2494
  %v2496 = vrot.slane %v2482, %v2495
  %v2497 = vcombine.low %v2489, %v2496
  %v2498 = vcombine.low %v217, %v225
  %v2499 = vcombine.low %v233, %v241
  %v2501 = vunpack.c.l.s4 1983009808
  %v2502 = vunpack.c.0.s8 %v2501
  %v2503 = vlaneseq
  %v2504 = vshrl.u32 %v2503, 7
  %v2505 = vsub.s32 %v2502, %v2504
  %v2506 = vrot.slane %v2498, %v2505
  %v2508 = vunpack.c.l.s4 1983009808
  %v2509 = vunpack.c.0.s8 %v2508
  %v2510 = vlaneseq
  %v2511 = vshrl.u32 %v2510, 7
  %v2512 = vsub.s32 %v2509, %v2511
  %v2513 = vrot.slane %v2499, %v2512
  %v2514 = vcombine.low %v2506, %v2513
  %v2515 = vcombine.low %v249, %v257
  %v2516 = vcombine.low %v265, %v273
  %v2518 = vunpack.c.l.s4 1983009808
  %v2519 = vunpack.c.0.s8 %v2518
  %v2520 = vlaneseq
  %v2521 = vshrl.u32 %v2520, 7
  %v2522 = vsub.s32 %v2519, %v2521
  %v2523 = vrot.slane %v2515, %v2522
  %v2525 = vunpack.c.l.s4 1983009808
  %v2526 = vunpack.c.0.s8 %v2525
  %v2527 = vlaneseq
  %v2528 = vshrl.u32 %v2527, 7
  %v2529 = vsub.s32 %v2526, %v2528
  %v2530 = vrot.slane %v2516, %v2529
  %v2531 = vcombine.low %v2523, %v2530
  %v2532 = vcombine.low %v281, %v289
  %v2533 = vcombine.low %v297, %v305
  %v2535 = vunpack.c.l.s4 1983009808
  %v2536 = vunpack.c.0.s8 %v2535
  %v2537 = vlaneseq
  %v2538 = vshrl.u32 %v2537, 7
  %v2539 = vsub.s32 %v2536, %v2538
  %v2540 = vrot.slane %v2532, %v2539
  %v2542 = vunpack.c.l.s4 1983009808
  %v2543 = vunpack.c.0.s8 %v2542
  %v2544 = vlaneseq
  %v2545 = vshrl.u32 %v2544, 7
  %v2546 = vsub.s32 %v2543, %v2545
  %v2547 = vrot.slane %v2533, %v2546
  %v2548 = vcombine.low %v2540, %v2547
  %v2549 = vcombine.low %v313, %v321
  %v2550 = vcombine.low %v329, %v337
  %v2552 = vunpack.c.l.s4 1983009808
  %v2553 = vunpack.c.0.s8 %v2552
  %v2554 = vlaneseq
  %v2555 = vshrl.u32 %v2554, 7
  %v2556 = vsub.s32 %v2553, %v2555
  %v2557 = vrot.slane %v2549, %v2556
  %v2559 = vunpack.c.l.s4 1983009808
  %v2560 = vunpack.c.0.s8 %v2559
  %v2561 = vlaneseq
  %v2562 = vshrl.u32 %v2561, 7
  %v2563 = vsub.s32 %v2560, %v2562
  %v2564 = vrot.slane %v2550, %v2563
  %v2565 = vcombine.low %v2557, %v2564
  %v2566 = vcombine.low %v345, %v353
  %v2567 = vcombine.low %v361, %v369
  %v2569 = vunpack.c.l.s4 1983009808
  %v2570 = vunpack.c.0.s8 %v2569
  %v2571 = vlaneseq
  %v2572 = vshrl.u32 %v2571, 7
  %v2573 = vsub.s32 %v2570, %v2572
  %v2574 = vrot.slane %v2566, %v2573
  %v2576 = vunpack.c.l.s4 1983009808
  %v2577 = vunpack.c.0.s8 %v2576
  %v2578 = vlaneseq
  %v2579 = vshrl.u32 %v2578, 7
  %v2580 = vsub.s32 %v2577, %v2579
  %v2581 = vrot.slane %v2567, %v2580
  %v2582 = vcombine.low %v2574, %v2581
  %v2584 = vsel %vm961, %v2463, 0
  %v2587 = vsel %vm961, %v2480, 0
  %v2590 = vsel %vm961, %v2497, 0
  %v2593 = vsel %vm961, %v2514, 0
  %v2596 = vsel %vm961, %v2531, 0
  %v2599 = vsel %vm961, %v2548, 0
  %v2602 = vsel %vm961, %v2565, 0
  %v2605 = vsel %vm961, %v2582, 0
  %v2608 = vsel %vm986, %v2446, 0
  %2610 = vmatprep.subr.bf16.mxu0 0
  %2611 = vmatpush1.bf16.msra.mxu0 0
  %2612 = vmatprep.subr.bf16.mxu0 0
  %2613 = vmatpush1.bf16.msra.mxu0 0
  %2614 = vmatprep.subr.bf16.mxu0 0
  %2615 = vmatpush1.bf16.msra.mxu0 0
  %2616 = vmatprep.subr.bf16.mxu0 0
  %2617 = vmatpush1.bf16.msra.mxu0 0
  %2618 = vmatprep.subr.bf16.mxu0 0
  %2619 = vmatpush1.bf16.msra.mxu0 0
  %2620 = vmatprep.subr.bf16.mxu0 0
  %2621 = vmatpush1.bf16.msra.mxu0 0
  %2622 = vmatprep.subr.bf16.mxu0 0
  %2623 = vmatpush1.bf16.msra.mxu0 0
  %2624 = vmatprep.subr.bf16.mxu0 0
  %2625 = vmatpush1.bf16.msra.mxu0 %v2608
  %2626 = vmatprep.subr.bf16.mxu0 0
  %2627 = vmatpush2.bf16.msra.mxu0 0
  %2628 = vmatprep.subr.bf16.mxu0 0
  %2629 = vmatpush2.bf16.msra.mxu0 0
  %2630 = vmatprep.subr.bf16.mxu0 0
  %2631 = vmatpush2.bf16.msra.mxu0 0
  %2632 = vmatprep.subr.bf16.mxu0 0
  %2633 = vmatpush2.bf16.msra.mxu0 0
  %2634 = vmatprep.subr.bf16.mxu0 0
  %2635 = vmatpush2.bf16.msra.mxu0 0
  %2636 = vmatprep.subr.bf16.mxu0 0
  %2637 = vmatpush2.bf16.msra.mxu0 0
  %2638 = vmatprep.subr.bf16.mxu0 0
  %2639 = vmatpush2.bf16.msra.mxu0 0
  %2640 = vmatprep.subr.bf16.mxu0 0
  %2641 = vmatpush2.bf16.msra.mxu0 0
  %2642 = vmatprep.mubr.bf16.mxu0 0
  %2643 = vmatmul.mubr.bf16.gmra.mxu0 %v2584
  %v2644 = vpop.f32.mrf.mxu0
  %v2645 = vadd.f32 0.0, %v2644
  %v2646 = vpop.f32.mrf.mxu0
  %v2647 = vpop.f32.mrf.mxu0
  %v2648 = vadd.f32 0.0, %v2647
  %v2649 = vpop.f32.mrf.mxu0
  %2650 = vmatprep.mubr.bf16.mxu0 0
  %2651 = vmatmul.mubr.bf16.gmra.mxu0 %v2587
  %v2652 = vpop.f32.mrf.mxu0
  %v2653 = vadd.f32 0.0, %v2652
  %v2654 = vpop.f32.mrf.mxu0
  %v2655 = vpop.f32.mrf.mxu0
  %v2656 = vadd.f32 0.0, %v2655
  %v2657 = vpop.f32.mrf.mxu0
  %2658 = vmatprep.mubr.bf16.mxu0 0
  %2659 = vmatmul.mubr.bf16.gmra.mxu0 %v2590
  %v2660 = vpop.f32.mrf.mxu0
  %v2661 = vadd.f32 0.0, %v2660
  %v2662 = vpop.f32.mrf.mxu0
  %v2663 = vpop.f32.mrf.mxu0
  %v2664 = vadd.f32 0.0, %v2663
  %v2665 = vpop.f32.mrf.mxu0
  %2666 = vmatprep.mubr.bf16.mxu0 0
  %2667 = vmatmul.mubr.bf16.gmra.mxu0 %v2593
  %v2668 = vpop.f32.mrf.mxu0
  %v2669 = vadd.f32 0.0, %v2668
  %v2670 = vpop.f32.mrf.mxu0
  %v2671 = vpop.f32.mrf.mxu0
  %v2672 = vadd.f32 0.0, %v2671
  %v2673 = vpop.f32.mrf.mxu0
  %2674 = vmatprep.mubr.bf16.mxu0 0
  %2675 = vmatmul.mubr.bf16.gmra.mxu0 %v2596
  %v2676 = vpop.f32.mrf.mxu0
  %v2677 = vadd.f32 0.0, %v2676
  %v2678 = vpop.f32.mrf.mxu0
  %v2679 = vpop.f32.mrf.mxu0
  %v2680 = vadd.f32 0.0, %v2679
  %v2681 = vpop.f32.mrf.mxu0
  %2682 = vmatprep.mubr.bf16.mxu0 0
  %2683 = vmatmul.mubr.bf16.gmra.mxu0 %v2599
  %v2684 = vpop.f32.mrf.mxu0
  %v2685 = vadd.f32 0.0, %v2684
  %v2686 = vpop.f32.mrf.mxu0
  %v2687 = vpop.f32.mrf.mxu0
  %v2688 = vadd.f32 0.0, %v2687
  %v2689 = vpop.f32.mrf.mxu0
  %2690 = vmatprep.mubr.bf16.mxu0 0
  %2691 = vmatmul.mubr.bf16.gmra.mxu0 %v2602
  %v2692 = vpop.f32.mrf.mxu0
  %v2693 = vadd.f32 0.0, %v2692
  %v2694 = vpop.f32.mrf.mxu0
  %v2695 = vpop.f32.mrf.mxu0
  %v2696 = vadd.f32 0.0, %v2695
  %v2697 = vpop.f32.mrf.mxu0
  %2698 = vmatprep.mubr.bf16.mxu0 0
  %2699 = vmatmul.mubr.bf16.gmra.mxu0 %v2605
  %v2700 = vpop.f32.mrf.mxu0
  %v2701 = vadd.f32 0.0, %v2700
  %v2702 = vpop.f32.mrf.mxu0
  %v2703 = vpop.f32.mrf.mxu0
  %v2704 = vadd.f32 0.0, %v2703
  %v2705 = vpop.f32.mrf.mxu0
  %2706 = vdwg.mxu0
  %v2723 = vcombine.high %v2645, %v2645
  %v2724 = vcombine.high %v2648, %v2648
  %v2725 = vcombine.high %v2653, %v2653
  %v2726 = vcombine.high %v2656, %v2656
  %v2727 = vcombine.high %v2661, %v2661
  %v2728 = vcombine.high %v2664, %v2664
  %v2729 = vcombine.high %v2669, %v2669
  %v2730 = vcombine.high %v2672, %v2672
  %v2731 = vcombine.high %v2677, %v2677
  %v2732 = vcombine.high %v2680, %v2680
  %v2733 = vcombine.high %v2685, %v2685
  %v2734 = vcombine.high %v2688, %v2688
  %v2735 = vcombine.high %v2693, %v2693
  %v2736 = vcombine.high %v2696, %v2696
  %v2737 = vcombine.high %v2701, %v2701
  %v2738 = vcombine.high %v2704, %v2704
  %v2755 = vadd.f32 %v2413, %v2645
  %v2756 = vadd.f32 %v2414, %v2723
  %v2757 = vadd.f32 %v2415, %v2648
  %v2758 = vadd.f32 %v2416, %v2724
  %v2759 = vadd.f32 %v2417, %v2653
  %v2760 = vadd.f32 %v2418, %v2725
  %v2761 = vadd.f32 %v2419, %v2656
  %v2762 = vadd.f32 %v2420, %v2726
  %v2763 = vadd.f32 %v2421, %v2661
  %v2764 = vadd.f32 %v2422, %v2727
  %v2765 = vadd.f32 %v2423, %v2664
  %v2766 = vadd.f32 %v2424, %v2728
  %v2767 = vadd.f32 %v2425, %v2669
  %v2768 = vadd.f32 %v2426, %v2729
  %v2769 = vadd.f32 %v2427, %v2672
  %v2770 = vadd.f32 %v2428, %v2730
  %v2771 = vadd.f32 %v2429, %v2677
  %v2772 = vadd.f32 %v2430, %v2731
  %v2773 = vadd.f32 %v2431, %v2680
  %v2774 = vadd.f32 %v2432, %v2732
  %v2775 = vadd.f32 %v2433, %v2685
  %v2776 = vadd.f32 %v2434, %v2733
  %v2777 = vadd.f32 %v2435, %v2688
  %v2778 = vadd.f32 %v2436, %v2734
  %v2779 = vadd.f32 %v2437, %v2693
  %v2780 = vadd.f32 %v2438, %v2735
  %v2781 = vadd.f32 %v2439, %v2696
  %v2782 = vadd.f32 %v2440, %v2736
  %v2783 = vadd.f32 %v2441, %v2701
  %v2784 = vadd.f32 %v2442, %v2737
  %v2785 = vadd.f32 %v2443, %v2704
  %v2786 = vadd.f32 %v2444, %v2738
  %v2787 = vld [vmem:[%s2] sm:$0x1]
  %v2789 = vlaneseq
  %v2790 = vshrl.u32 %v2789, 7
  %v2791 = vsub.s32 0, %v2790
  %v2792 = vrot.slane %v2787, %v2791
  %v2794 = vadd.f32 %v2755, %v2792
  %v2795 = vadd.f32 %v2756, %v2792
  %v2796 = vadd.f32 %v2757, %v2792
  %v2797 = vadd.f32 %v2758, %v2792
  %v2798 = vadd.f32 %v2759, %v2792
  %v2799 = vadd.f32 %v2760, %v2792
  %v2800 = vadd.f32 %v2761, %v2792
  %v2801 = vadd.f32 %v2762, %v2792
  %v2802 = vadd.f32 %v2763, %v2792
  %v2803 = vadd.f32 %v2764, %v2792
  %v2804 = vadd.f32 %v2765, %v2792
  %v2805 = vadd.f32 %v2766, %v2792
  %v2806 = vadd.f32 %v2767, %v2792
  %v2807 = vadd.f32 %v2768, %v2792
  %v2808 = vadd.f32 %v2769, %v2792
  %v2809 = vadd.f32 %v2770, %v2792
  %v2810 = vadd.f32 %v2771, %v2792
  %v2811 = vadd.f32 %v2772, %v2792
  %v2812 = vadd.f32 %v2773, %v2792
  %v2813 = vadd.f32 %v2774, %v2792
  %v2814 = vadd.f32 %v2775, %v2792
  %v2815 = vadd.f32 %v2776, %v2792
  %v2816 = vadd.f32 %v2777, %v2792
  %v2817 = vadd.f32 %v2778, %v2792
  %v2818 = vadd.f32 %v2779, %v2792
  %v2819 = vadd.f32 %v2780, %v2792
  %v2820 = vadd.f32 %v2781, %v2792
  %v2821 = vadd.f32 %v2782, %v2792
  %v2822 = vadd.f32 %v2783, %v2792
  %v2823 = vadd.f32 %v2784, %v2792
  %v2824 = vadd.f32 %v2785, %v2792
  %v2825 = vadd.f32 %v2786, %v2792
  %vm2826 = vcmask 125952
  %v2827 = vsel %vm2826, %v2794, -inf
  %v2828 = vrot.slane %v2827, 4
  %v2829 = vmax.f32 %v2827, %v2828
  %v2830 = vrot.slane %v2829, 2
  %v2831 = vmax.f32 %v2829, %v2830
  %v2832 = vrot.slane %v2831, 1
  %v2833 = vmax.f32 %v2831, %v2832
  %v2834 = vsel %vm2826, %v2795, -inf
  %v2835 = vrot.slane %v2834, 4
  %v2836 = vmax.f32 %v2834, %v2835
  %v2837 = vrot.slane %v2836, 2
  %v2838 = vmax.f32 %v2836, %v2837
  %v2839 = vrot.slane %v2838, 1
  %v2840 = vmax.f32 %v2838, %v2839
  %v2841 = vsel %vm2826, %v2796, -inf
  %v2842 = vrot.slane %v2841, 4
  %v2843 = vmax.f32 %v2841, %v2842
  %v2844 = vrot.slane %v2843, 2
  %v2845 = vmax.f32 %v2843, %v2844
  %v2846 = vrot.slane %v2845, 1
  %v2847 = vmax.f32 %v2845, %v2846
  %v2848 = vsel %vm2826, %v2797, -inf
  %v2849 = vrot.slane %v2848, 4
  %v2850 = vmax.f32 %v2848, %v2849
  %v2851 = vrot.slane %v2850, 2
  %v2852 = vmax.f32 %v2850, %v2851
  %v2853 = vrot.slane %v2852, 1
  %v2854 = vmax.f32 %v2852, %v2853
  %v2855 = vsel %vm2826, %v2798, -inf
  %v2856 = vrot.slane %v2855, 4
  %v2857 = vmax.f32 %v2855, %v2856
  %v2858 = vrot.slane %v2857, 2
  %v2859 = vmax.f32 %v2857, %v2858
  %v2860 = vrot.slane %v2859, 1
  %v2861 = vmax.f32 %v2859, %v2860
  %v2862 = vsel %vm2826, %v2799, -inf
  %v2863 = vrot.slane %v2862, 4
  %v2864 = vmax.f32 %v2862, %v2863
  %v2865 = vrot.slane %v2864, 2
  %v2866 = vmax.f32 %v2864, %v2865
  %v2867 = vrot.slane %v2866, 1
  %v2868 = vmax.f32 %v2866, %v2867
  %v2869 = vsel %vm2826, %v2800, -inf
  %v2870 = vrot.slane %v2869, 4
  %v2871 = vmax.f32 %v2869, %v2870
  %v2872 = vrot.slane %v2871, 2
  %v2873 = vmax.f32 %v2871, %v2872
  %v2874 = vrot.slane %v2873, 1
  %v2875 = vmax.f32 %v2873, %v2874
  %v2876 = vsel %vm2826, %v2801, -inf
  %v2877 = vrot.slane %v2876, 4
  %v2878 = vmax.f32 %v2876, %v2877
  %v2879 = vrot.slane %v2878, 2
  %v2880 = vmax.f32 %v2878, %v2879
  %v2881 = vrot.slane %v2880, 1
  %v2882 = vmax.f32 %v2880, %v2881
  %v2883 = vsel %vm2826, %v2802, -inf
  %v2884 = vrot.slane %v2883, 4
  %v2885 = vmax.f32 %v2883, %v2884
  %v2886 = vrot.slane %v2885, 2
  %v2887 = vmax.f32 %v2885, %v2886
  %v2888 = vrot.slane %v2887, 1
  %v2889 = vmax.f32 %v2887, %v2888
  %v2890 = vsel %vm2826, %v2803, -inf
  %v2891 = vrot.slane %v2890, 4
  %v2892 = vmax.f32 %v2890, %v2891
  %v2893 = vrot.slane %v2892, 2
  %v2894 = vmax.f32 %v2892, %v2893
  %v2895 = vrot.slane %v2894, 1
  %v2896 = vmax.f32 %v2894, %v2895
  %v2897 = vsel %vm2826, %v2804, -inf
  %v2898 = vrot.slane %v2897, 4
  %v2899 = vmax.f32 %v2897, %v2898
  %v2900 = vrot.slane %v2899, 2
  %v2901 = vmax.f32 %v2899, %v2900
  %v2902 = vrot.slane %v2901, 1
  %v2903 = vmax.f32 %v2901, %v2902
  %v2904 = vsel %vm2826, %v2805, -inf
  %v2905 = vrot.slane %v2904, 4
  %v2906 = vmax.f32 %v2904, %v2905
  %v2907 = vrot.slane %v2906, 2
  %v2908 = vmax.f32 %v2906, %v2907
  %v2909 = vrot.slane %v2908, 1
  %v2910 = vmax.f32 %v2908, %v2909
  %v2911 = vsel %vm2826, %v2806, -inf
  %v2912 = vrot.slane %v2911, 4
  %v2913 = vmax.f32 %v2911, %v2912
  %v2914 = vrot.slane %v2913, 2
  %v2915 = vmax.f32 %v2913, %v2914
  %v2916 = vrot.slane %v2915, 1
  %v2917 = vmax.f32 %v2915, %v2916
  %v2918 = vsel %vm2826, %v2807, -inf
  %v2919 = vrot.slane %v2918, 4
  %v2920 = vmax.f32 %v2918, %v2919
  %v2921 = vrot.slane %v2920, 2
  %v2922 = vmax.f32 %v2920, %v2921
  %v2923 = vrot.slane %v2922, 1
  %v2924 = vmax.f32 %v2922, %v2923
  %v2925 = vsel %vm2826, %v2808, -inf
  %v2926 = vrot.slane %v2925, 4
  %v2927 = vmax.f32 %v2925, %v2926
  %v2928 = vrot.slane %v2927, 2
  %v2929 = vmax.f32 %v2927, %v2928
  %v2930 = vrot.slane %v2929, 1
  %v2931 = vmax.f32 %v2929, %v2930
  %v2932 = vsel %vm2826, %v2809, -inf
  %v2933 = vrot.slane %v2932, 4
  %v2934 = vmax.f32 %v2932, %v2933
  %v2935 = vrot.slane %v2934, 2
  %v2936 = vmax.f32 %v2934, %v2935
  %v2937 = vrot.slane %v2936, 1
  %v2938 = vmax.f32 %v2936, %v2937
  %v2939 = vsel %vm2826, %v2810, -inf
  %v2940 = vrot.slane %v2939, 4
  %v2941 = vmax.f32 %v2939, %v2940
  %v2942 = vrot.slane %v2941, 2
  %v2943 = vmax.f32 %v2941, %v2942
  %v2944 = vrot.slane %v2943, 1
  %v2945 = vmax.f32 %v2943, %v2944
  %v2946 = vsel %vm2826, %v2811, -inf
  %v2947 = vrot.slane %v2946, 4
  %v2948 = vmax.f32 %v2946, %v2947
  %v2949 = vrot.slane %v2948, 2
  %v2950 = vmax.f32 %v2948, %v2949
  %v2951 = vrot.slane %v2950, 1
  %v2952 = vmax.f32 %v2950, %v2951
  %v2953 = vsel %vm2826, %v2812, -inf
  %v2954 = vrot.slane %v2953, 4
  %v2955 = vmax.f32 %v2953, %v2954
  %v2956 = vrot.slane %v2955, 2
  %v2957 = vmax.f32 %v2955, %v2956
  %v2958 = vrot.slane %v2957, 1
  %v2959 = vmax.f32 %v2957, %v2958
  %v2960 = vsel %vm2826, %v2813, -inf
  %v2961 = vrot.slane %v2960, 4
  %v2962 = vmax.f32 %v2960, %v2961
  %v2963 = vrot.slane %v2962, 2
  %v2964 = vmax.f32 %v2962, %v2963
  %v2965 = vrot.slane %v2964, 1
  %v2966 = vmax.f32 %v2964, %v2965
  %v2967 = vsel %vm2826, %v2814, -inf
  %v2968 = vrot.slane %v2967, 4
  %v2969 = vmax.f32 %v2967, %v2968
  %v2970 = vrot.slane %v2969, 2
  %v2971 = vmax.f32 %v2969, %v2970
  %v2972 = vrot.slane %v2971, 1
  %v2973 = vmax.f32 %v2971, %v2972
  %v2974 = vsel %vm2826, %v2815, -inf
  %v2975 = vrot.slane %v2974, 4
  %v2976 = vmax.f32 %v2974, %v2975
  %v2977 = vrot.slane %v2976, 2
  %v2978 = vmax.f32 %v2976, %v2977
  %v2979 = vrot.slane %v2978, 1
  %v2980 = vmax.f32 %v2978, %v2979
  %v2981 = vsel %vm2826, %v2816, -inf
  %v2982 = vrot.slane %v2981, 4
  %v2983 = vmax.f32 %v2981, %v2982
  %v2984 = vrot.slane %v2983, 2
  %v2985 = vmax.f32 %v2983, %v2984
  %v2986 = vrot.slane %v2985, 1
  %v2987 = vmax.f32 %v2985, %v2986
  %v2988 = vsel %vm2826, %v2817, -inf
  %v2989 = vrot.slane %v2988, 4
  %v2990 = vmax.f32 %v2988, %v2989
  %v2991 = vrot.slane %v2990, 2
  %v2992 = vmax.f32 %v2990, %v2991
  %v2993 = vrot.slane %v2992, 1
  %v2994 = vmax.f32 %v2992, %v2993
  %v2995 = vsel %vm2826, %v2818, -inf
  %v2996 = vrot.slane %v2995, 4
  %v2997 = vmax.f32 %v2995, %v2996
  %v2998 = vrot.slane %v2997, 2
  %v2999 = vmax.f32 %v2997, %v2998
  %v3000 = vrot.slane %v2999, 1
  %v3001 = vmax.f32 %v2999, %v3000
  %v3002 = vsel %vm2826, %v2819, -inf
  %v3003 = vrot.slane %v3002, 4
  %v3004 = vmax.f32 %v3002, %v3003
  %v3005 = vrot.slane %v3004, 2
  %v3006 = vmax.f32 %v3004, %v3005
  %v3007 = vrot.slane %v3006, 1
  %v3008 = vmax.f32 %v3006, %v3007
  %v3009 = vsel %vm2826, %v2820, -inf
  %v3010 = vrot.slane %v3009, 4
  %v3011 = vmax.f32 %v3009, %v3010
  %v3012 = vrot.slane %v3011, 2
  %v3013 = vmax.f32 %v3011, %v3012
  %v3014 = vrot.slane %v3013, 1
  %v3015 = vmax.f32 %v3013, %v3014
  %v3016 = vsel %vm2826, %v2821, -inf
  %v3017 = vrot.slane %v3016, 4
  %v3018 = vmax.f32 %v3016, %v3017
  %v3019 = vrot.slane %v3018, 2
  %v3020 = vmax.f32 %v3018, %v3019
  %v3021 = vrot.slane %v3020, 1
  %v3022 = vmax.f32 %v3020, %v3021
  %v3023 = vsel %vm2826, %v2822, -inf
  %v3024 = vrot.slane %v3023, 4
  %v3025 = vmax.f32 %v3023, %v3024
  %v3026 = vrot.slane %v3025, 2
  %v3027 = vmax.f32 %v3025, %v3026
  %v3028 = vrot.slane %v3027, 1
  %v3029 = vmax.f32 %v3027, %v3028
  %v3030 = vsel %vm2826, %v2823, -inf
  %v3031 = vrot.slane %v3030, 4
  %v3032 = vmax.f32 %v3030, %v3031
  %v3033 = vrot.slane %v3032, 2
  %v3034 = vmax.f32 %v3032, %v3033
  %v3035 = vrot.slane %v3034, 1
  %v3036 = vmax.f32 %v3034, %v3035
  %v3037 = vsel %vm2826, %v2824, -inf
  %v3038 = vrot.slane %v3037, 4
  %v3039 = vmax.f32 %v3037, %v3038
  %v3040 = vrot.slane %v3039, 2
  %v3041 = vmax.f32 %v3039, %v3040
  %v3042 = vrot.slane %v3041, 1
  %v3043 = vmax.f32 %v3041, %v3042
  %v3044 = vsel %vm2826, %v2825, -inf
  %v3045 = vrot.slane %v3044, 4
  %v3046 = vmax.f32 %v3044, %v3045
  %v3047 = vrot.slane %v3046, 2
  %v3048 = vmax.f32 %v3046, %v3047
  %v3049 = vrot.slane %v3048, 1
  %v3050 = vmax.f32 %v3048, %v3049
  %vm3083 = vcmask 1041409
  %v3084 = vsel %vm3083, %v2840, %v2833
  %vm3085 = vcmask 1042434
  %v3086 = vsel %vm3085, %v2847, %v3084
  %vm3087 = vcmask 1043459
  %v3088 = vsel %vm3087, %v2854, %v3086
  %vm3089 = vcmask 1044484
  %v3090 = vsel %vm3089, %v2861, %v3088
  %vm3091 = vcmask 1045509
  %v3092 = vsel %vm3091, %v2868, %v3090
  %vm3093 = vcmask 1046534
  %v3094 = vsel %vm3093, %v2875, %v3092
  %vm3095 = vcmask 1047559
  %v3096 = vsel %vm3095, %v2882, %v3094
  %v3097 = vsel %vm3083, %v2896, %v2889
  %v3098 = vsel %vm3085, %v2903, %v3097
  %v3099 = vsel %vm3087, %v2910, %v3098
  %v3100 = vsel %vm3089, %v2917, %v3099
  %v3101 = vsel %vm3091, %v2924, %v3100
  %v3102 = vsel %vm3093, %v2931, %v3101
  %v3103 = vsel %vm3095, %v2938, %v3102
  %v3104 = vsel %vm3083, %v2952, %v2945
  %v3105 = vsel %vm3085, %v2959, %v3104
  %v3106 = vsel %vm3087, %v2966, %v3105
  %v3107 = vsel %vm3089, %v2973, %v3106
  %v3108 = vsel %vm3091, %v2980, %v3107
  %v3109 = vsel %vm3093, %v2987, %v3108
  %v3110 = vsel %vm3095, %v2994, %v3109
  %v3111 = vsel %vm3083, %v3008, %v3001
  %v3112 = vsel %vm3085, %v3015, %v3111
  %v3113 = vsel %vm3087, %v3022, %v3112
  %v3114 = vsel %vm3089, %v3029, %v3113
  %v3115 = vsel %vm3091, %v3036, %v3114
  %v3116 = vsel %vm3093, %v3043, %v3115
  %v3117 = vsel %vm3095, %v3050, %v3116
  %vm3122 = vcmask 130048
  %3123 = vst.msk [vmem:[%s3] sm:$0xff] %vm3122, %v3096
  %3124 = vst.msk [vmem:[%s3 + $0x8] sm:$0xff] %vm3122, %v3103
  %3125 = vst.msk [vmem:[%s3 + $0x10] sm:$0xff] %vm3122, %v3110
  %3126 = vst.msk [vmem:[%s3 + $0x18] sm:$0xff] %vm3122, %v3117
  // Predicated region
  $region14: #{tpu_custom_call.1} parent=0 // pred_check
    _
  $region15: #{tpu_custom_call.1} parent=0 // pred_check_branch
    %3128 = sbr.rel (0) target = $region17
  $region16: #{tpu_custom_call.1} parent=0 // pred_region
    _
  $region17: #{tpu_custom_call.1} parent=0 // pred_fallthru
    _
  // Predicated region
  $region18: #{tpu_custom_call.1} parent=0 // pred_check
    _
  $region19: #{tpu_custom_call.1} parent=0 // pred_check_branch
    %3130 = sbr.rel (0) target = $region21
  $region20: #{tpu_custom_call.1} parent=0 // pred_region
    _
  $region21: #{tpu_custom_call.1} parent=0 // pred_fallthru
    _

</llo_original>
